<compile_context>
chip_gen: v7x
topology: tpu7x:2x2x1
jax: 0.10.0
libtpu: 0.0.40
codegen_flags: <defaults>
</compile_context>

<pallas_src>
import functools

import jax
import jax.numpy as jnp
from jax.experimental import pallas as pl
from jax.experimental.pallas import tpu as pltpu

EPS = 1e-5
NEG_INF = -1e9  # mask add / softmax stats stay in f32, so -1e9 is safe


def _layernorm(x, g, b):
    mu = jnp.mean(x, axis=-1, keepdims=True)
    var = jnp.mean((x - mu) ** 2, axis=-1, keepdims=True)
    return (x - mu) * jax.lax.rsqrt(var + EPS) * g + b


def _vmem_limit_bytes():
    # Generation-aware VMEM budget: leave headroom below physical capacity
    # (128 MiB on v5e/v6e, 64 MiB on v7x) so double-buffered weight windows
    # plus the residual/attn scratch always fit.
    try:
        cap = int(pltpu.get_tpu_info().vmem_capacity_bytes)
    except Exception:
        cap = 64 * 1024 * 1024
    return min(cap - 16 * 1024 * 1024, 100 * 1024 * 1024)


# ----------------------------------------------------------------------------
# Fused transformer-stack kernel.  grid = (batch blocks, layers).
# ----------------------------------------------------------------------------
def text_stack_kernel(x_ref, pos_ref, lnfg_ref, lnfb_ref,
                      ln1g_ref, ln1b_ref,
                      wqkv_ref, bqkv_ref, wo_ref, bo_ref,
                      ln2g_ref, ln2b_ref,
                      w1_ref, b1_ref, w2_ref, b2_ref,
                      o_ref, x_vmem, attn_vmem, mask_vmem, *, num_heads):
    l = pl.program_id(1)

    # Layer 0 (per batch block): fuse `prompts + positional_embedding`, make the
    # residual stream VMEM-resident, and build the causal mask once.
    @pl.when(l == 0)
    def _():
        x_vmem[...] = (x_ref[...].astype(jnp.float32)
                       + pos_ref[...].astype(jnp.float32)[None, :, :])
        row = jax.lax.broadcasted_iota(jnp.int32, mask_vmem.shape, 0)
        col = jax.lax.broadcasted_iota(jnp.int32, mask_vmem.shape, 1)
        mask_vmem[...] = jnp.where(col <= row, 0.0, NEG_INF).astype(jnp.float32)

    x = x_vmem[...]                                    # (Bb, S, D) f32 residual
    Bb, S, D = x.shape
    H = num_heads
    Hd = D // H
    mask = mask_vmem[...]                              # (S, S) additive mask

    # ---------------- multi-head self-attention (pre-LN) ----------------
    xn = _layernorm(x, ln1g_ref[...][None], ln1b_ref[...][None])

    # Single lane-dense QKV projection (full MXU width; 1/sqrt(Hd) already
    # folded into the Q columns of wqkv / bqkv at weight-prep time).
    qkv = jnp.einsum('bsd,de->bse', xn.astype(jnp.bfloat16), wqkv_ref[...],
                     preferred_element_type=jnp.float32) + bqkv_ref[...][None]
    qkv_bf = qkv.astype(jnp.bfloat16)

    # Per-head score / softmax / AV on static lane slices of the fused QKV.
    # Head outputs land directly in a VMEM scratch (no traced accumulator).
    for h in range(H):
        q = qkv_bf[:, :, 0 * D + h * Hd: 0 * D + (h + 1) * Hd]
        k = qkv_bf[:, :, 1 * D + h * Hd: 1 * D + (h + 1) * Hd]
        v = qkv_bf[:, :, 2 * D + h * Hd: 2 * D + (h + 1) * Hd]
        s = jnp.einsum('bqe,bke->bqk', q, k,
                       preferred_element_type=jnp.float32) + mask[None]
        m = jnp.max(s, axis=-1, keepdims=True)         # softmax stats in f32
        e = jnp.exp(s - m)
        p = e * pl.reciprocal(jnp.sum(e, axis=-1, keepdims=True), approx=True)
        attn_vmem[:, :, h * Hd:(h + 1) * Hd] = jnp.einsum(
            'bqk,bke->bqe', p.astype(jnp.bfloat16), v,
            preferred_element_type=jnp.float32)

    # Single lane-dense output projection over the reassembled heads.
    attn = attn_vmem[...]
    x = x + jnp.einsum('bsd,de->bse', attn.astype(jnp.bfloat16), wo_ref[...],
                       preferred_element_type=jnp.float32) + bo_ref[...][None]

    # ---------------- MLP (pre-LN, QuickGELU) ----------------
    xn = _layernorm(x, ln2g_ref[...][None], ln2b_ref[...][None])
    h1 = jnp.einsum('bsd,de->bse', xn.astype(jnp.bfloat16), w1_ref[...],
                    preferred_element_type=jnp.float32) + b1_ref[...][None]
    h1 = h1 * jax.nn.sigmoid(1.702 * h1)               # QuickGELU in f32
    h2 = jnp.einsum('bsd,de->bse', h1.astype(jnp.bfloat16), w2_ref[...],
                    preferred_element_type=jnp.float32) + b2_ref[...][None]
    x = x + h2
    x_vmem[...] = x

    # Last layer: fused ln_final, single lane-dense output write per batch block.
    @pl.when(l == pl.num_programs(1) - 1)
    def _():
        o_ref[...] = _layernorm(x, lnfg_ref[...][None],
                                lnfb_ref[...][None]).astype(o_ref.dtype)


# ----------------------------------------------------------------------------
# Weight restructuring: stack layers on a leading L axis, keep wqkv / wo as
# lane-dense slabs, fold 1/sqrt(Hd) into the Q columns, cast matmul weights
# to bf16.
# ----------------------------------------------------------------------------
def _stack_layer_params(layers, num_heads):
    D = layers[0]['wqkv'].shape[0]
    Hd = D // num_heads
    scale = 1.0 / (Hd ** 0.5)
    st = lambda name: jnp.stack([p[name] for p in layers], axis=0)

    wqkv = st('wqkv')                                  # (L, D, 3D), cols [q|k|v]
    bqkv = st('bqkv')                                  # (L, 1, 3D)
    col_scale = jnp.concatenate(
        [jnp.full((D,), scale, jnp.float32), jnp.ones((2 * D,), jnp.float32)])
    wqkv = wqkv * col_scale[None, None, :]
    bqkv = bqkv * col_scale[None, None, :]

    return {
        'ln1_g': st('ln1_g'), 'ln1_b': st('ln1_b'),
        'wqkv': wqkv.astype(jnp.bfloat16), 'bqkv': bqkv,
        'wo': st('wo').astype(jnp.bfloat16), 'bo': st('bo'),
        'ln2_g': st('ln2_g'), 'ln2_b': st('ln2_b'),
        'w1': st('w1').astype(jnp.bfloat16), 'b1': st('b1'),
        'w2': st('w2').astype(jnp.bfloat16), 'b2': st('b2'),
    }


# ----------------------------------------------------------------------------
# Wrapper: one pallas_call for the whole TextEncoder forward.
# ----------------------------------------------------------------------------
def text_encoder_forward(prompts, params, num_heads, *, block_b=None):
    B, S, D = prompts.shape
    L = len(params['layers'])
    F = params['layers'][0]['w1'].shape[1]
    if block_b is None:
        # Whole batch per block: weights stream HBM->VMEM exactly once.
        # On v7x set block_b=B//2 so nb=2 feeds both TensorCores.
        block_b = B
    assert B % block_b == 0
    nb = B // block_b

    stw = _stack_layer_params(params['layers'], num_heads)

    xmap = lambda b, l: (b, 0, 0)          # activations / output (per batch block)
    cmap2 = lambda b, l: (0, 0)            # constants (pos_emb, ln_final)
    lmap3 = lambda b, l: (l, 0, 0)         # per-layer stacked weights

    in_specs = [
        pl.BlockSpec((block_b, S, D), xmap),           # prompts
        pl.BlockSpec((S, D), cmap2),                   # positional embedding
        pl.BlockSpec((1, D), cmap2),                   # ln_final gamma
        pl.BlockSpec((1, D), cmap2),                   # ln_final beta
        pl.BlockSpec((None, 1, D), lmap3),             # ln1 gamma
        pl.BlockSpec((None, 1, D), lmap3),             # ln1 beta
        pl.BlockSpec((None, D, 3 * D), lmap3),         # wqkv (lane-dense)
        pl.BlockSpec((None, 1, 3 * D), lmap3),         # bqkv (lane-dense)
        pl.BlockSpec((None, D, D), lmap3),             # wo
        pl.BlockSpec((None, 1, D), lmap3),             # bo
        pl.BlockSpec((None, 1, D), lmap3),             # ln2 gamma
        pl.BlockSpec((None, 1, D), lmap3),             # ln2 beta
        pl.BlockSpec((None, D, F), lmap3),             # w1
        pl.BlockSpec((None, 1, F), lmap3),             # b1
        pl.BlockSpec((None, F, D), lmap3),             # w2
        pl.BlockSpec((None, 1, D), lmap3),             # b2
    ]

    grid_spec = pltpu.PrefetchScalarGridSpec(
        num_scalar_prefetch=0,
        grid=(nb, L),                                   # (batch blocks, layers)
        in_specs=in_specs,
        out_specs=pl.BlockSpec((block_b, S, D), xmap),
        scratch_shapes=[
            pltpu.VMEM((block_b, S, D), jnp.float32),   # residual stream
            pltpu.VMEM((block_b, S, D), jnp.float32),   # per-head attn output
            pltpu.VMEM((S, S), jnp.float32),            # causal mask (built once)
        ],
    )

    return pl.pallas_call(
        functools.partial(text_stack_kernel, num_heads=num_heads),
        out_shape=jax.ShapeDtypeStruct((B, S, D), prompts.dtype),
        grid_spec=grid_spec,
        compiler_params=pltpu.CompilerParams(
            dimension_semantics=("parallel", "arbitrary"),
            vmem_limit_bytes=_vmem_limit_bytes(),
        ),
    )(prompts, params['pos_emb'], params['lnf_g'], params['lnf_b'],
      stw['ln1_g'], stw['ln1_b'], stw['wqkv'], stw['bqkv'], stw['wo'], stw['bo'],
      stw['ln2_g'], stw['ln2_b'], stw['w1'], stw['b1'], stw['w2'], stw['b2'])


# ----------------------------------------------------------------------------
# Pure-JAX f32 reference (PyTorch semantics) for verification
# ----------------------------------------------------------------------------
def reference_forward(prompts, params, num_heads):
    x = prompts + params['pos_emb'][None]
    S = x.shape[1]
    mask = jnp.where(jnp.tril(jnp.ones((S, S), bool)), 0.0, NEG_INF).astype(jnp.float32)
    for p in params['layers']:
        D = x.shape[-1]
        Hd = D // num_heads
        xn = _layernorm(x, p['ln1_g'][None], p['ln1_b'][None])
        qkv = jnp.einsum('bsd,de->bse', xn, p['wqkv']) + p['bqkv'][None]
        q, k, v = qkv[..., :D] / (Hd ** 0.5), qkv[..., D:2 * D], qkv[..., 2 * D:]
        heads = []
        for h in range(num_heads):
            sl = slice(h * Hd, (h + 1) * Hd)
            s = jnp.einsum('bqd,bkd->bqk', q[..., sl], k[..., sl]) + mask[None]
            heads.append(jnp.einsum('bqk,bkd->bqd', jax.nn.softmax(s, -1), v[..., sl]))
        attn = jnp.concatenate(heads, -1)
        x = x + jnp.einsum('bsd,de->bse', attn, p['wo']) + p['bo'][None]
        xn = _layernorm(x, p['ln2_g'][None], p['ln2_b'][None])
        h1 = jnp.einsum('bsd,de->bse', xn, p['w1']) + p['b1'][None]
        h1 = h1 * jax.nn.sigmoid(1.702 * h1)
        x = x + jnp.einsum('bsd,de->bse', h1, p['w2']) + p['b2'][None]
    return _layernorm(x, params['lnf_g'][None], params['lnf_b'][None])


# ----------------------------------------------------------------------------
# Deterministic parameter construction
# ----------------------------------------------------------------------------
def make_params(key, n_layers, seq, dim, mlp_dim, scale=0.1):
    keys = iter(jax.random.split(key, 3 + 12 * n_layers))

    def randn(shape, s=scale):
        return (s * jax.random.normal(next(keys), shape)).astype(jnp.float32)

    params = {
        'pos_emb': randn((seq, dim)),
        'lnf_g': 1.0 + randn((1, dim)),
        'lnf_b': randn((1, dim)),
        'layers': [],
    }
    for _ in range(n_layers):
        params['layers'].append({
            'ln1_g': 1.0 + randn((1, dim)),
            'ln1_b': randn((1, dim)),
            'wqkv': randn((dim, 3 * dim)),   # (in, out), columns [q | k | v]
            'bqkv': randn((1, 3 * dim)),
            'wo': randn((dim, dim)),
            'bo': randn((1, dim)),
            'ln2_g': 1.0 + randn((1, dim)),
            'ln2_b': randn((1, dim)),
            'w1': randn((dim, mlp_dim)),
            'b1': randn((1, mlp_dim)),
            'w2': randn((mlp_dim, dim)),
            'b2': randn((1, dim)),
        })
    return params


if __name__ == "__main__":
    B, S, D, H, L = 2, 8, 32, 4, 2
    MLP = 4 * D

    key = jax.random.PRNGKey(0)
    k_prompt, k_params = jax.random.split(key)
    prompts = jax.random.normal(k_prompt, (B, S, D), jnp.float32)
    params = make_params(k_params, L, S, D, MLP)

    out = jax.block_until_ready(text_encoder_forward(prompts, params, H))
    ref = reference_forward(prompts, params, H)

    assert out.shape == (B, S, D)
    # bf16 MXU operands + approx-reciprocal softmax vs. pure-f32 reference.
    assert jnp.allclose(out, ref, atol=3e-2, rtol=3e-2), \
        float(jnp.max(jnp.abs(out - ref)))
    print("KERNEL_OK")
</pallas_src>

<mosaic_0001>
module attributes {stable_mosaic.version = 11 : i64} {
  func.func @text_stack_kernel(%arg0: i32, %arg1: i32, %arg2: memref<2x8x32xf32, #tpu.memory_space<vmem>>, %arg3: memref<8x32xf32, #tpu.memory_space<vmem>>, %arg4: memref<1x32xf32, #tpu.memory_space<vmem>>, %arg5: memref<1x32xf32, #tpu.memory_space<vmem>>, %arg6: memref<1x1x32xf32, #tpu.memory_space<vmem>>, %arg7: memref<1x1x32xf32, #tpu.memory_space<vmem>>, %arg8: memref<1x32x96xbf16, #tpu.memory_space<vmem>>, %arg9: memref<1x1x96xf32, #tpu.memory_space<vmem>>, %arg10: memref<1x32x32xbf16, #tpu.memory_space<vmem>>, %arg11: memref<1x1x32xf32, #tpu.memory_space<vmem>>, %arg12: memref<1x1x32xf32, #tpu.memory_space<vmem>>, %arg13: memref<1x1x32xf32, #tpu.memory_space<vmem>>, %arg14: memref<1x32x128xbf16, #tpu.memory_space<vmem>>, %arg15: memref<1x1x128xf32, #tpu.memory_space<vmem>>, %arg16: memref<1x128x32xbf16, #tpu.memory_space<vmem>>, %arg17: memref<1x1x32xf32, #tpu.memory_space<vmem>>, %arg18: memref<2x8x32xf32, #tpu.memory_space<vmem>>, %arg19: memref<2x8x32xf32, #tpu.memory_space<vmem>>, %arg20: memref<2x8x32xf32, #tpu.memory_space<vmem>>, %arg21: memref<8x8xf32, #tpu.memory_space<vmem>>) attributes {dimension_semantics = [#tpu.dimension_semantics<parallel>, #tpu.dimension_semantics<arbitrary>], iteration_bounds = array<i64: 1, 2>, scalar_prefetch = 0 : i64, scratch_operands = 3 : i64, tpu.core_type = #tpu.core_type<tc>, window_params = [{transform_indices = @transform_0, window_bounds = array<i64: 2, 8, 32>}, {pipeline_mode = #tpu.pipeline_mode<synchronous>, transform_indices = @transform_1, window_bounds = array<i64: 8, 32>}, {pipeline_mode = #tpu.pipeline_mode<synchronous>, transform_indices = @transform_2, window_bounds = array<i64: 1, 32>}, {pipeline_mode = #tpu.pipeline_mode<synchronous>, transform_indices = @transform_3, window_bounds = array<i64: 1, 32>}, {transform_indices = @transform_4, window_bounds = array<i64: 1, 1, 32>}, {transform_indices = @transform_5, window_bounds = array<i64: 1, 1, 32>}, {transform_indices = @transform_6, window_bounds = array<i64: 1, 32, 96>}, {transform_indices = @transform_7, window_bounds = array<i64: 1, 1, 96>}, {transform_indices = @transform_8, window_bounds = array<i64: 1, 32, 32>}, {transform_indices = @transform_9, window_bounds = array<i64: 1, 1, 32>}, {transform_indices = @transform_10, window_bounds = array<i64: 1, 1, 32>}, {transform_indices = @transform_11, window_bounds = array<i64: 1, 1, 32>}, {transform_indices = @transform_12, window_bounds = array<i64: 1, 32, 128>}, {transform_indices = @transform_13, window_bounds = array<i64: 1, 1, 128>}, {transform_indices = @transform_14, window_bounds = array<i64: 1, 128, 32>}, {transform_indices = @transform_15, window_bounds = array<i64: 1, 1, 32>}, {transform_indices = @transform_16, window_bounds = array<i64: 2, 8, 32>}]} {
    %c0_i32 = arith.constant 0 : i32
    %0 = arith.cmpi eq, %arg1, %c0_i32 : i32
    %1 = arith.extui %0 : i1 to i32
    %c0_i32_0 = arith.constant 0 : i32
    %2 = arith.cmpi ne, %1, %c0_i32_0 : i32
    scf.if %2 {
      %c0_88 = arith.constant 0 : index
      %c0_89 = arith.constant 0 : index
      %c0_90 = arith.constant 0 : index
      %193 = vector.load %arg2[%c0_88, %c0_89, %c0_90] : memref<2x8x32xf32, #tpu.memory_space<vmem>>, vector<2x8x32xf32>
      %c0_91 = arith.constant 0 : index
      %c0_92 = arith.constant 0 : index
      %194 = vector.load %arg3[%c0_91, %c0_92] : memref<8x32xf32, #tpu.memory_space<vmem>>, vector<8x32xf32>
      %195 = vector.shape_cast %194 : vector<8x32xf32> to vector<1x8x32xf32>
      %196 = vector.broadcast %195 : vector<1x8x32xf32> to vector<2x8x32xf32>
      %197 = arith.addf %193, %196 : vector<2x8x32xf32>
      %c0_93 = arith.constant 0 : index
      %c0_94 = arith.constant 0 : index
      %c0_95 = arith.constant 0 : index
      %198 = vector.load %arg19[%c0_93, %c0_94, %c0_95] : memref<2x8x32xf32, #tpu.memory_space<vmem>>, vector<2x8x32xf32>
      tpu.vector_store %arg19[%c0_93, %c0_94, %c0_95], %197 {strides = array<i32>} : memref<2x8x32xf32, #tpu.memory_space<vmem>>, vector<2x8x32xf32>,
      %199 = tpu.iota {dimensions = array<i32: 0>} : vector<8x8xi32>
      %200 = tpu.iota {dimensions = array<i32: 1>} : vector<8x8xi32>
      %201 = arith.cmpi sle, %200, %199 : vector<8x8xi32>
      %cst_96 = arith.constant 0.000000e+00 : f32
      %cst_97 = arith.constant -1.000000e+09 : f32
      %202 = vector.broadcast %cst_96 : f32 to vector<8x8xf32>
      %203 = vector.broadcast %cst_97 : f32 to vector<8x8xf32>
      %204 = arith.select %201, %202, %203 : vector<8x8xi1>, vector<8x8xf32>
      %c0_98 = arith.constant 0 : index
      %c0_99 = arith.constant 0 : index
      %205 = vector.load %arg21[%c0_98, %c0_99] : memref<8x8xf32, #tpu.memory_space<vmem>>, vector<8x8xf32>
      tpu.vector_store %arg21[%c0_98, %c0_99], %204 {strides = array<i32>} : memref<8x8xf32, #tpu.memory_space<vmem>>, vector<8x8xf32>,
    } else {
    }
    %c0 = arith.constant 0 : index
    %c0_1 = arith.constant 0 : index
    %c0_2 = arith.constant 0 : index
    %3 = vector.load %arg19[%c0, %c0_1, %c0_2] : memref<2x8x32xf32, #tpu.memory_space<vmem>>, vector<2x8x32xf32>
    %c0_3 = arith.constant 0 : index
    %c0_4 = arith.constant 0 : index
    %4 = vector.load %arg21[%c0_3, %c0_4] : memref<8x8xf32, #tpu.memory_space<vmem>>, vector<8x8xf32>
    %c0_5 = arith.constant 0 : index
    %c0_6 = arith.constant 0 : index
    %c0_7 = arith.constant 0 : index
    %5 = vector.load %arg6[%c0_5, %c0_6, %c0_7] : memref<1x1x32xf32, #tpu.memory_space<vmem>>, vector<1x1x32xf32>
    %6 = vector.shape_cast %5 : vector<1x1x32xf32> to vector<1x32xf32>
    %7 = vector.shape_cast %6 : vector<1x32xf32> to vector<1x1x32xf32>
    %c0_8 = arith.constant 0 : index
    %c0_9 = arith.constant 0 : index
    %c0_10 = arith.constant 0 : index
    %8 = vector.load %arg7[%c0_8, %c0_9, %c0_10] : memref<1x1x32xf32, #tpu.memory_space<vmem>>, vector<1x1x32xf32>
    %9 = vector.shape_cast %8 : vector<1x1x32xf32> to vector<1x32xf32>
    %10 = vector.shape_cast %9 : vector<1x32xf32> to vector<1x1x32xf32>
    %cst = arith.constant dense<0.000000e+00> : vector<2x8xf32>
    %11 = vector.multi_reduction <add>, %3, %cst [2] : vector<2x8x32xf32> to vector<2x8xf32>
    %12 = vector.shape_cast %11 : vector<2x8xf32> to vector<2x8x1xf32>
    %cst_11 = arith.constant 3.200000e+01 : f32
    %13 = vector.broadcast %cst_11 : f32 to vector<2x8x1xf32>
    %14 = arith.divf %12, %13 : vector<2x8x1xf32>
    %15 = vector.broadcast %14 : vector<2x8x1xf32> to vector<2x8x32xf32>
    %16 = arith.subf %3, %15 : vector<2x8x32xf32>
    %17 = arith.mulf %16, %16 : vector<2x8x32xf32>
    %cst_12 = arith.constant dense<0.000000e+00> : vector<2x8xf32>
    %18 = vector.multi_reduction <add>, %17, %cst_12 [2] : vector<2x8x32xf32> to vector<2x8xf32>
    %19 = vector.shape_cast %18 : vector<2x8xf32> to vector<2x8x1xf32>
    %cst_13 = arith.constant 3.200000e+01 : f32
    %20 = vector.broadcast %cst_13 : f32 to vector<2x8x1xf32>
    %21 = arith.divf %19, %20 : vector<2x8x1xf32>
    %22 = vector.broadcast %14 : vector<2x8x1xf32> to vector<2x8x32xf32>
    %23 = arith.subf %3, %22 : vector<2x8x32xf32>
    %cst_14 = arith.constant 9.99999974E-6 : f32
    %24 = vector.broadcast %cst_14 : f32 to vector<2x8x1xf32>
    %25 = arith.addf %21, %24 : vector<2x8x1xf32>
    %26 = math.rsqrt %25 : vector<2x8x1xf32>
    %27 = vector.broadcast %26 : vector<2x8x1xf32> to vector<2x8x32xf32>
    %28 = arith.mulf %23, %27 : vector<2x8x32xf32>
    %29 = vector.broadcast %7 : vector<1x1x32xf32> to vector<2x8x32xf32>
    %30 = arith.mulf %28, %29 : vector<2x8x32xf32>
    %31 = vector.broadcast %10 : vector<1x1x32xf32> to vector<2x8x32xf32>
    %32 = arith.addf %30, %31 : vector<2x8x32xf32>
    %33 = arith.truncf %32 : vector<2x8x32xf32> to vector<2x8x32xbf16>
    %c0_15 = arith.constant 0 : index
    %c0_16 = arith.constant 0 : index
    %c0_17 = arith.constant 0 : index
    %34 = vector.load %arg8[%c0_15, %c0_16, %c0_17] : memref<1x32x96xbf16, #tpu.memory_space<vmem>>, vector<1x32x96xbf16>
    %35 = vector.shape_cast %34 : vector<1x32x96xbf16> to vector<32x96xbf16>
    "tpu.trace_start"() <{level = 10 : i32, message = "bsd,de->bse"}> : () -> ()
    %cst_18 = arith.constant dense<0.000000e+00> : vector<2x8x96xf32>
    %36 = tpu.matmul %33, %35, %cst_18 {dimension_numbers = #tpu.dot_dimension_numbers<[2], [0], [0, 1], [1], [0, 0, 0, 1, 1, 1], [], []>} : vector<2x8x32xbf16>, vector<32x96xbf16>, vector<2x8x96xf32> -> vector<2x8x96xf32>
    "tpu.trace_stop"() : () -> ()
    %c0_19 = arith.constant 0 : index
    %c0_20 = arith.constant 0 : index
    %c0_21 = arith.constant 0 : index
    %37 = vector.load %arg9[%c0_19, %c0_20, %c0_21] : memref<1x1x96xf32, #tpu.memory_space<vmem>>, vector<1x1x96xf32>
    %38 = vector.shape_cast %37 : vector<1x1x96xf32> to vector<1x96xf32>
    %39 = vector.shape_cast %38 : vector<1x96xf32> to vector<1x1x96xf32>
    %40 = vector.broadcast %39 : vector<1x1x96xf32> to vector<2x8x96xf32>
    %41 = arith.addf %36, %40 : vector<2x8x96xf32>
    %42 = arith.truncf %41 : vector<2x8x96xf32> to vector<2x8x96xbf16>
    %43 = vector.extract_strided_slice %42 {offsets = [0, 0, 0], sizes = [2, 8, 8], strides = [1, 1, 1]} : vector<2x8x96xbf16> to vector<2x8x8xbf16>
    %44 = vector.extract_strided_slice %42 {offsets = [0, 0, 32], sizes = [2, 8, 8], strides = [1, 1, 1]} : vector<2x8x96xbf16> to vector<2x8x8xbf16>
    %45 = vector.extract_strided_slice %42 {offsets = [0, 0, 64], sizes = [2, 8, 8], strides = [1, 1, 1]} : vector<2x8x96xbf16> to vector<2x8x8xbf16>
    "tpu.trace_start"() <{level = 10 : i32, message = "bqe,bke->bqk"}> : () -> ()
    %cst_22 = arith.constant dense<0.000000e+00> : vector<2x8x8xf32>
    %46 = tpu.matmul %43, %44, %cst_22 {dimension_numbers = #tpu.dot_dimension_numbers<[2], [2], [1], [1], [0, 0, 0, 1, 1, 1], [0], [0]>} : vector<2x8x8xbf16>, vector<2x8x8xbf16>, vector<2x8x8xf32> -> vector<2x8x8xf32>
    "tpu.trace_stop"() : () -> ()
    %47 = vector.shape_cast %4 : vector<8x8xf32> to vector<1x8x8xf32>
    %48 = vector.broadcast %47 : vector<1x8x8xf32> to vector<2x8x8xf32>
    %49 = arith.addf %46, %48 : vector<2x8x8xf32>
    %cst_23 = arith.constant dense<0xFF800000> : vector<2x8xf32>
    %50 = vector.multi_reduction <maximumf>, %49, %cst_23 [2] : vector<2x8x8xf32> to vector<2x8xf32>
    %51 = vector.shape_cast %50 : vector<2x8xf32> to vector<2x8x1xf32>
    %52 = vector.broadcast %51 : vector<2x8x1xf32> to vector<2x8x8xf32>
    %53 = arith.subf %49, %52 : vector<2x8x8xf32>
    %54 = math.exp %53 : vector<2x8x8xf32>
    %cst_24 = arith.constant dense<0.000000e+00> : vector<2x8xf32>
    %55 = vector.multi_reduction <add>, %54, %cst_24 [2] : vector<2x8x8xf32> to vector<2x8xf32>
    %56 = vector.shape_cast %55 : vector<2x8xf32> to vector<2x8x1xf32>
    %57 = tpu.reciprocal %56 {approx = true} : vector<2x8x1xf32> -> vector<2x8x1xf32>
    %58 = vector.broadcast %57 : vector<2x8x1xf32> to vector<2x8x8xf32>
    %59 = arith.mulf %54, %58 : vector<2x8x8xf32>
    %60 = arith.truncf %59 : vector<2x8x8xf32> to vector<2x8x8xbf16>
    "tpu.trace_start"() <{level = 10 : i32, message = "bqk,bke->bqe"}> : () -> ()
    %cst_25 = arith.constant dense<0.000000e+00> : vector<2x8x8xf32>
    %61 = tpu.matmul %60, %45, %cst_25 {dimension_numbers = #tpu.dot_dimension_numbers<[2], [1], [1], [2], [0, 0, 0, 1, 1, 2], [0], [0]>} : vector<2x8x8xbf16>, vector<2x8x8xbf16>, vector<2x8x8xf32> -> vector<2x8x8xf32>
    "tpu.trace_stop"() : () -> ()
    %c0_26 = arith.constant 0 : index
    %c0_27 = arith.constant 0 : index
    %c0_28 = arith.constant 0 : index
    %62 = vector.load %arg20[%c0_26, %c0_27, %c0_28] : memref<2x8x32xf32, #tpu.memory_space<vmem>>, vector<2x8x8xf32>
    tpu.vector_store %arg20[%c0_26, %c0_27, %c0_28], %61 {strides = array<i32>} : memref<2x8x32xf32, #tpu.memory_space<vmem>>, vector<2x8x8xf32>,
    %63 = vector.extract_strided_slice %42 {offsets = [0, 0, 8], sizes = [2, 8, 8], strides = [1, 1, 1]} : vector<2x8x96xbf16> to vector<2x8x8xbf16>
    %64 = vector.extract_strided_slice %42 {offsets = [0, 0, 40], sizes = [2, 8, 8], strides = [1, 1, 1]} : vector<2x8x96xbf16> to vector<2x8x8xbf16>
    %65 = vector.extract_strided_slice %42 {offsets = [0, 0, 72], sizes = [2, 8, 8], strides = [1, 1, 1]} : vector<2x8x96xbf16> to vector<2x8x8xbf16>
    "tpu.trace_start"() <{level = 10 : i32, message = "bqe,bke->bqk"}> : () -> ()
    %cst_29 = arith.constant dense<0.000000e+00> : vector<2x8x8xf32>
    %66 = tpu.matmul %63, %64, %cst_29 {dimension_numbers = #tpu.dot_dimension_numbers<[2], [2], [1], [1], [0, 0, 0, 1, 1, 1], [0], [0]>} : vector<2x8x8xbf16>, vector<2x8x8xbf16>, vector<2x8x8xf32> -> vector<2x8x8xf32>
    "tpu.trace_stop"() : () -> ()
    %67 = vector.shape_cast %4 : vector<8x8xf32> to vector<1x8x8xf32>
    %68 = vector.broadcast %67 : vector<1x8x8xf32> to vector<2x8x8xf32>
    %69 = arith.addf %66, %68 : vector<2x8x8xf32>
    %cst_30 = arith.constant dense<0xFF800000> : vector<2x8xf32>
    %70 = vector.multi_reduction <maximumf>, %69, %cst_30 [2] : vector<2x8x8xf32> to vector<2x8xf32>
    %71 = vector.shape_cast %70 : vector<2x8xf32> to vector<2x8x1xf32>
    %72 = vector.broadcast %71 : vector<2x8x1xf32> to vector<2x8x8xf32>
    %73 = arith.subf %69, %72 : vector<2x8x8xf32>
    %74 = math.exp %73 : vector<2x8x8xf32>
    %cst_31 = arith.constant dense<0.000000e+00> : vector<2x8xf32>
    %75 = vector.multi_reduction <add>, %74, %cst_31 [2] : vector<2x8x8xf32> to vector<2x8xf32>
    %76 = vector.shape_cast %75 : vector<2x8xf32> to vector<2x8x1xf32>
    %77 = tpu.reciprocal %76 {approx = true} : vector<2x8x1xf32> -> vector<2x8x1xf32>
    %78 = vector.broadcast %77 : vector<2x8x1xf32> to vector<2x8x8xf32>
    %79 = arith.mulf %74, %78 : vector<2x8x8xf32>
    %80 = arith.truncf %79 : vector<2x8x8xf32> to vector<2x8x8xbf16>
    "tpu.trace_start"() <{level = 10 : i32, message = "bqk,bke->bqe"}> : () -> ()
    %cst_32 = arith.constant dense<0.000000e+00> : vector<2x8x8xf32>
    %81 = tpu.matmul %80, %65, %cst_32 {dimension_numbers = #tpu.dot_dimension_numbers<[2], [1], [1], [2], [0, 0, 0, 1, 1, 2], [0], [0]>} : vector<2x8x8xbf16>, vector<2x8x8xbf16>, vector<2x8x8xf32> -> vector<2x8x8xf32>
    "tpu.trace_stop"() : () -> ()
    %c0_33 = arith.constant 0 : index
    %c0_34 = arith.constant 0 : index
    %c8 = arith.constant 8 : index
    %82 = vector.load %arg20[%c0_33, %c0_34, %c8] : memref<2x8x32xf32, #tpu.memory_space<vmem>>, vector<2x8x8xf32>
    tpu.vector_store %arg20[%c0_33, %c0_34, %c8], %81 {strides = array<i32>} : memref<2x8x32xf32, #tpu.memory_space<vmem>>, vector<2x8x8xf32>,
    %83 = vector.extract_strided_slice %42 {offsets = [0, 0, 16], sizes = [2, 8, 8], strides = [1, 1, 1]} : vector<2x8x96xbf16> to vector<2x8x8xbf16>
    %84 = vector.extract_strided_slice %42 {offsets = [0, 0, 48], sizes = [2, 8, 8], strides = [1, 1, 1]} : vector<2x8x96xbf16> to vector<2x8x8xbf16>
    %85 = vector.extract_strided_slice %42 {offsets = [0, 0, 80], sizes = [2, 8, 8], strides = [1, 1, 1]} : vector<2x8x96xbf16> to vector<2x8x8xbf16>
    "tpu.trace_start"() <{level = 10 : i32, message = "bqe,bke->bqk"}> : () -> ()
    %cst_35 = arith.constant dense<0.000000e+00> : vector<2x8x8xf32>
    %86 = tpu.matmul %83, %84, %cst_35 {dimension_numbers = #tpu.dot_dimension_numbers<[2], [2], [1], [1], [0, 0, 0, 1, 1, 1], [0], [0]>} : vector<2x8x8xbf16>, vector<2x8x8xbf16>, vector<2x8x8xf32> -> vector<2x8x8xf32>
    "tpu.trace_stop"() : () -> ()
    %87 = vector.shape_cast %4 : vector<8x8xf32> to vector<1x8x8xf32>
    %88 = vector.broadcast %87 : vector<1x8x8xf32> to vector<2x8x8xf32>
    %89 = arith.addf %86, %88 : vector<2x8x8xf32>
    %cst_36 = arith.constant dense<0xFF800000> : vector<2x8xf32>
    %90 = vector.multi_reduction <maximumf>, %89, %cst_36 [2] : vector<2x8x8xf32> to vector<2x8xf32>
    %91 = vector.shape_cast %90 : vector<2x8xf32> to vector<2x8x1xf32>
    %92 = vector.broadcast %91 : vector<2x8x1xf32> to vector<2x8x8xf32>
    %93 = arith.subf %89, %92 : vector<2x8x8xf32>
    %94 = math.exp %93 : vector<2x8x8xf32>
    %cst_37 = arith.constant dense<0.000000e+00> : vector<2x8xf32>
    %95 = vector.multi_reduction <add>, %94, %cst_37 [2] : vector<2x8x8xf32> to vector<2x8xf32>
    %96 = vector.shape_cast %95 : vector<2x8xf32> to vector<2x8x1xf32>
    %97 = tpu.reciprocal %96 {approx = true} : vector<2x8x1xf32> -> vector<2x8x1xf32>
    %98 = vector.broadcast %97 : vector<2x8x1xf32> to vector<2x8x8xf32>
    %99 = arith.mulf %94, %98 : vector<2x8x8xf32>
    %100 = arith.truncf %99 : vector<2x8x8xf32> to vector<2x8x8xbf16>
    "tpu.trace_start"() <{level = 10 : i32, message = "bqk,bke->bqe"}> : () -> ()
    %cst_38 = arith.constant dense<0.000000e+00> : vector<2x8x8xf32>
    %101 = tpu.matmul %100, %85, %cst_38 {dimension_numbers = #tpu.dot_dimension_numbers<[2], [1], [1], [2], [0, 0, 0, 1, 1, 2], [0], [0]>} : vector<2x8x8xbf16>, vector<2x8x8xbf16>, vector<2x8x8xf32> -> vector<2x8x8xf32>
    "tpu.trace_stop"() : () -> ()
    %c0_39 = arith.constant 0 : index
    %c0_40 = arith.constant 0 : index
    %c16 = arith.constant 16 : index
    %102 = vector.load %arg20[%c0_39, %c0_40, %c16] : memref<2x8x32xf32, #tpu.memory_space<vmem>>, vector<2x8x8xf32>
    tpu.vector_store %arg20[%c0_39, %c0_40, %c16], %101 {strides = array<i32>} : memref<2x8x32xf32, #tpu.memory_space<vmem>>, vector<2x8x8xf32>,
    %103 = vector.extract_strided_slice %42 {offsets = [0, 0, 24], sizes = [2, 8, 8], strides = [1, 1, 1]} : vector<2x8x96xbf16> to vector<2x8x8xbf16>
    %104 = vector.extract_strided_slice %42 {offsets = [0, 0, 56], sizes = [2, 8, 8], strides = [1, 1, 1]} : vector<2x8x96xbf16> to vector<2x8x8xbf16>
    %105 = vector.extract_strided_slice %42 {offsets = [0, 0, 88], sizes = [2, 8, 8], strides = [1, 1, 1]} : vector<2x8x96xbf16> to vector<2x8x8xbf16>
    "tpu.trace_start"() <{level = 10 : i32, message = "bqe,bke->bqk"}> : () -> ()
    %cst_41 = arith.constant dense<0.000000e+00> : vector<2x8x8xf32>
    %106 = tpu.matmul %103, %104, %cst_41 {dimension_numbers = #tpu.dot_dimension_numbers<[2], [2], [1], [1], [0, 0, 0, 1, 1, 1], [0], [0]>} : vector<2x8x8xbf16>, vector<2x8x8xbf16>, vector<2x8x8xf32> -> vector<2x8x8xf32>
    "tpu.trace_stop"() : () -> ()
    %107 = vector.shape_cast %4 : vector<8x8xf32> to vector<1x8x8xf32>
    %108 = vector.broadcast %107 : vector<1x8x8xf32> to vector<2x8x8xf32>
    %109 = arith.addf %106, %108 : vector<2x8x8xf32>
    %cst_42 = arith.constant dense<0xFF800000> : vector<2x8xf32>
    %110 = vector.multi_reduction <maximumf>, %109, %cst_42 [2] : vector<2x8x8xf32> to vector<2x8xf32>
    %111 = vector.shape_cast %110 : vector<2x8xf32> to vector<2x8x1xf32>
    %112 = vector.broadcast %111 : vector<2x8x1xf32> to vector<2x8x8xf32>
    %113 = arith.subf %109, %112 : vector<2x8x8xf32>
    %114 = math.exp %113 : vector<2x8x8xf32>
    %cst_43 = arith.constant dense<0.000000e+00> : vector<2x8xf32>
    %115 = vector.multi_reduction <add>, %114, %cst_43 [2] : vector<2x8x8xf32> to vector<2x8xf32>
    %116 = vector.shape_cast %115 : vector<2x8xf32> to vector<2x8x1xf32>
    %117 = tpu.reciprocal %116 {approx = true} : vector<2x8x1xf32> -> vector<2x8x1xf32>
    %118 = vector.broadcast %117 : vector<2x8x1xf32> to vector<2x8x8xf32>
    %119 = arith.mulf %114, %118 : vector<2x8x8xf32>
    %120 = arith.truncf %119 : vector<2x8x8xf32> to vector<2x8x8xbf16>
    "tpu.trace_start"() <{level = 10 : i32, message = "bqk,bke->bqe"}> : () -> ()
    %cst_44 = arith.constant dense<0.000000e+00> : vector<2x8x8xf32>
    %121 = tpu.matmul %120, %105, %cst_44 {dimension_numbers = #tpu.dot_dimension_numbers<[2], [1], [1], [2], [0, 0, 0, 1, 1, 2], [0], [0]>} : vector<2x8x8xbf16>, vector<2x8x8xbf16>, vector<2x8x8xf32> -> vector<2x8x8xf32>
    "tpu.trace_stop"() : () -> ()
    %c0_45 = arith.constant 0 : index
    %c0_46 = arith.constant 0 : index
    %c24 = arith.constant 24 : index
    %122 = vector.load %arg20[%c0_45, %c0_46, %c24] : memref<2x8x32xf32, #tpu.memory_space<vmem>>, vector<2x8x8xf32>
    tpu.vector_store %arg20[%c0_45, %c0_46, %c24], %121 {strides = array<i32>} : memref<2x8x32xf32, #tpu.memory_space<vmem>>, vector<2x8x8xf32>,
    %c0_47 = arith.constant 0 : index
    %c0_48 = arith.constant 0 : index
    %c0_49 = arith.constant 0 : index
    %123 = vector.load %arg20[%c0_47, %c0_48, %c0_49] : memref<2x8x32xf32, #tpu.memory_space<vmem>>, vector<2x8x32xf32>
    %124 = arith.truncf %123 : vector<2x8x32xf32> to vector<2x8x32xbf16>
    %c0_50 = arith.constant 0 : index
    %c0_51 = arith.constant 0 : index
    %c0_52 = arith.constant 0 : index
    %125 = vector.load %arg10[%c0_50, %c0_51, %c0_52] : memref<1x32x32xbf16, #tpu.memory_space<vmem>>, vector<1x32x32xbf16>
    %126 = vector.shape_cast %125 : vector<1x32x32xbf16> to vector<32x32xbf16>
    "tpu.trace_start"() <{level = 10 : i32, message = "bsd,de->bse"}> : () -> ()
    %cst_53 = arith.constant dense<0.000000e+00> : vector<2x8x32xf32>
    %127 = tpu.matmul %124, %126, %cst_53 {dimension_numbers = #tpu.dot_dimension_numbers<[2], [0], [0, 1], [1], [0, 0, 0, 1, 1, 1], [], []>} : vector<2x8x32xbf16>, vector<32x32xbf16>, vector<2x8x32xf32> -> vector<2x8x32xf32>
    "tpu.trace_stop"() : () -> ()
    %128 = arith.addf %3, %127 : vector<2x8x32xf32>
    %c0_54 = arith.constant 0 : index
    %c0_55 = arith.constant 0 : index
    %c0_56 = arith.constant 0 : index
    %129 = vector.load %arg11[%c0_54, %c0_55, %c0_56] : memref<1x1x32xf32, #tpu.memory_space<vmem>>, vector<1x1x32xf32>
    %130 = vector.shape_cast %129 : vector<1x1x32xf32> to vector<1x32xf32>
    %131 = vector.shape_cast %130 : vector<1x32xf32> to vector<1x1x32xf32>
    %132 = vector.broadcast %131 : vector<1x1x32xf32> to vector<2x8x32xf32>
    %133 = arith.addf %128, %132 : vector<2x8x32xf32>
    %c0_57 = arith.constant 0 : index
    %c0_58 = arith.constant 0 : index
    %c0_59 = arith.constant 0 : index
    %134 = vector.load %arg12[%c0_57, %c0_58, %c0_59] : memref<1x1x32xf32, #tpu.memory_space<vmem>>, vector<1x1x32xf32>
    %135 = vector.shape_cast %134 : vector<1x1x32xf32> to vector<1x32xf32>
    %136 = vector.shape_cast %135 : vector<1x32xf32> to vector<1x1x32xf32>
    %c0_60 = arith.constant 0 : index
    %c0_61 = arith.constant 0 : index
    %c0_62 = arith.constant 0 : index
    %137 = vector.load %arg13[%c0_60, %c0_61, %c0_62] : memref<1x1x32xf32, #tpu.memory_space<vmem>>, vector<1x1x32xf32>
    %138 = vector.shape_cast %137 : vector<1x1x32xf32> to vector<1x32xf32>
    %139 = vector.shape_cast %138 : vector<1x32xf32> to vector<1x1x32xf32>
    %cst_63 = arith.constant dense<0.000000e+00> : vector<2x8xf32>
    %140 = vector.multi_reduction <add>, %133, %cst_63 [2] : vector<2x8x32xf32> to vector<2x8xf32>
    %141 = vector.shape_cast %140 : vector<2x8xf32> to vector<2x8x1xf32>
    %cst_64 = arith.constant 3.200000e+01 : f32
    %142 = vector.broadcast %cst_64 : f32 to vector<2x8x1xf32>
    %143 = arith.divf %141, %142 : vector<2x8x1xf32>
    %144 = vector.broadcast %143 : vector<2x8x1xf32> to vector<2x8x32xf32>
    %145 = arith.subf %133, %144 : vector<2x8x32xf32>
    %146 = arith.mulf %145, %145 : vector<2x8x32xf32>
    %cst_65 = arith.constant dense<0.000000e+00> : vector<2x8xf32>
    %147 = vector.multi_reduction <add>, %146, %cst_65 [2] : vector<2x8x32xf32> to vector<2x8xf32>
    %148 = vector.shape_cast %147 : vector<2x8xf32> to vector<2x8x1xf32>
    %cst_66 = arith.constant 3.200000e+01 : f32
    %149 = vector.broadcast %cst_66 : f32 to vector<2x8x1xf32>
    %150 = arith.divf %148, %149 : vector<2x8x1xf32>
    %151 = vector.broadcast %143 : vector<2x8x1xf32> to vector<2x8x32xf32>
    %152 = arith.subf %133, %151 : vector<2x8x32xf32>
    %cst_67 = arith.constant 9.99999974E-6 : f32
    %153 = vector.broadcast %cst_67 : f32 to vector<2x8x1xf32>
    %154 = arith.addf %150, %153 : vector<2x8x1xf32>
    %155 = math.rsqrt %154 : vector<2x8x1xf32>
    %156 = vector.broadcast %155 : vector<2x8x1xf32> to vector<2x8x32xf32>
    %157 = arith.mulf %152, %156 : vector<2x8x32xf32>
    %158 = vector.broadcast %136 : vector<1x1x32xf32> to vector<2x8x32xf32>
    %159 = arith.mulf %157, %158 : vector<2x8x32xf32>
    %160 = vector.broadcast %139 : vector<1x1x32xf32> to vector<2x8x32xf32>
    %161 = arith.addf %159, %160 : vector<2x8x32xf32>
    %162 = arith.truncf %161 : vector<2x8x32xf32> to vector<2x8x32xbf16>
    %c0_68 = arith.constant 0 : index
    %c0_69 = arith.constant 0 : index
    %c0_70 = arith.constant 0 : index
    %163 = vector.load %arg14[%c0_68, %c0_69, %c0_70] : memref<1x32x128xbf16, #tpu.memory_space<vmem>>, vector<1x32x128xbf16>
    %164 = vector.shape_cast %163 : vector<1x32x128xbf16> to vector<32x128xbf16>
    "tpu.trace_start"() <{level = 10 : i32, message = "bsd,de->bse"}> : () -> ()
    %cst_71 = arith.constant dense<0.000000e+00> : vector<2x8x128xf32>
    %165 = tpu.matmul %162, %164, %cst_71 {dimension_numbers = #tpu.dot_dimension_numbers<[2], [0], [0, 1], [1], [0, 0, 0, 1, 1, 1], [], []>} : vector<2x8x32xbf16>, vector<32x128xbf16>, vector<2x8x128xf32> -> vector<2x8x128xf32>
    "tpu.trace_stop"() : () -> ()
    %c0_72 = arith.constant 0 : index
    %c0_73 = arith.constant 0 : index
    %c0_74 = arith.constant 0 : index
    %166 = vector.load %arg15[%c0_72, %c0_73, %c0_74] : memref<1x1x128xf32, #tpu.memory_space<vmem>>, vector<1x1x128xf32>
    %167 = vector.shape_cast %166 : vector<1x1x128xf32> to vector<1x128xf32>
    %168 = vector.shape_cast %167 : vector<1x128xf32> to vector<1x1x128xf32>
    %169 = vector.broadcast %168 : vector<1x1x128xf32> to vector<2x8x128xf32>
    %170 = arith.addf %165, %169 : vector<2x8x128xf32>
    %cst_75 = arith.constant 1.702000e+00 : f32
    %171 = vector.broadcast %cst_75 : f32 to vector<2x8x128xf32>
    %172 = arith.mulf %171, %170 : vector<2x8x128xf32>
    %173 = arith.negf %172 : vector<2x8x128xf32>
    %174 = math.exp %173 : vector<2x8x128xf32>
    %cst_76 = arith.constant 1.000000e+00 : f32
    %175 = vector.broadcast %cst_76 : f32 to vector<2x8x128xf32>
    %176 = arith.addf %175, %174 : vector<2x8x128xf32>
    %177 = arith.divf %175, %176 : vector<2x8x128xf32>
    %178 = arith.mulf %170, %177 : vector<2x8x128xf32>
    %179 = arith.truncf %178 : vector<2x8x128xf32> to vector<2x8x128xbf16>
    %c0_77 = arith.constant 0 : index
    %c0_78 = arith.constant 0 : index
    %c0_79 = arith.constant 0 : index
    %180 = vector.load %arg16[%c0_77, %c0_78, %c0_79] : memref<1x128x32xbf16, #tpu.memory_space<vmem>>, vector<1x128x32xbf16>
    %181 = vector.shape_cast %180 : vector<1x128x32xbf16> to vector<128x32xbf16>
    "tpu.trace_start"() <{level = 10 : i32, message = "bsd,de->bse"}> : () -> ()
    %cst_80 = arith.constant dense<0.000000e+00> : vector<2x8x32xf32>
    %182 = tpu.matmul %179, %181, %cst_80 {dimension_numbers = #tpu.dot_dimension_numbers<[2], [0], [0, 1], [1], [0, 0, 0, 1, 1, 1], [], []>} : vector<2x8x128xbf16>, vector<128x32xbf16>, vector<2x8x32xf32> -> vector<2x8x32xf32>
    "tpu.trace_stop"() : () -> ()
    %c0_81 = arith.constant 0 : index
    %c0_82 = arith.constant 0 : index
    %c0_83 = arith.constant 0 : index
    %183 = vector.load %arg17[%c0_81, %c0_82, %c0_83] : memref<1x1x32xf32, #tpu.memory_space<vmem>>, vector<1x1x32xf32>
    %184 = vector.shape_cast %183 : vector<1x1x32xf32> to vector<1x32xf32>
    %185 = vector.shape_cast %184 : vector<1x32xf32> to vector<1x1x32xf32>
    %186 = vector.broadcast %185 : vector<1x1x32xf32> to vector<2x8x32xf32>
    %187 = arith.addf %182, %186 : vector<2x8x32xf32>
    %188 = arith.addf %133, %187 : vector<2x8x32xf32>
    %c0_84 = arith.constant 0 : index
    %c0_85 = arith.constant 0 : index
    %c0_86 = arith.constant 0 : index
    %189 = vector.load %arg19[%c0_84, %c0_85, %c0_86] : memref<2x8x32xf32, #tpu.memory_space<vmem>>, vector<2x8x32xf32>
    tpu.vector_store %arg19[%c0_84, %c0_85, %c0_86], %188 {strides = array<i32>} : memref<2x8x32xf32, #tpu.memory_space<vmem>>, vector<2x8x32xf32>,
    %c1_i32 = arith.constant 1 : i32
    %190 = arith.cmpi eq, %arg1, %c1_i32 : i32
    %191 = arith.extui %190 : i1 to i32
    %c0_i32_87 = arith.constant 0 : i32
    %192 = arith.cmpi ne, %191, %c0_i32_87 : i32
    scf.if %192 {
      %c0_88 = arith.constant 0 : index
      %c0_89 = arith.constant 0 : index
      %193 = vector.load %arg4[%c0_88, %c0_89] : memref<1x32xf32, #tpu.memory_space<vmem>>, vector<1x32xf32>
      %194 = vector.shape_cast %193 : vector<1x32xf32> to vector<1x1x32xf32>
      %c0_90 = arith.constant 0 : index
      %c0_91 = arith.constant 0 : index
      %195 = vector.load %arg5[%c0_90, %c0_91] : memref<1x32xf32, #tpu.memory_space<vmem>>, vector<1x32xf32>
      %196 = vector.shape_cast %195 : vector<1x32xf32> to vector<1x1x32xf32>
      %cst_92 = arith.constant dense<0.000000e+00> : vector<2x8xf32>
      %197 = vector.multi_reduction <add>, %188, %cst_92 [2] : vector<2x8x32xf32> to vector<2x8xf32>
      %198 = vector.shape_cast %197 : vector<2x8xf32> to vector<2x8x1xf32>
      %cst_93 = arith.constant 3.200000e+01 : f32
      %199 = vector.broadcast %cst_93 : f32 to vector<2x8x1xf32>
      %200 = arith.divf %198, %199 : vector<2x8x1xf32>
      %201 = vector.broadcast %200 : vector<2x8x1xf32> to vector<2x8x32xf32>
      %202 = arith.subf %188, %201 : vector<2x8x32xf32>
      %203 = arith.mulf %202, %202 : vector<2x8x32xf32>
      %cst_94 = arith.constant dense<0.000000e+00> : vector<2x8xf32>
      %204 = vector.multi_reduction <add>, %203, %cst_94 [2] : vector<2x8x32xf32> to vector<2x8xf32>
      %205 = vector.shape_cast %204 : vector<2x8xf32> to vector<2x8x1xf32>
      %cst_95 = arith.constant 3.200000e+01 : f32
      %206 = vector.broadcast %cst_95 : f32 to vector<2x8x1xf32>
      %207 = arith.divf %205, %206 : vector<2x8x1xf32>
      %208 = vector.broadcast %200 : vector<2x8x1xf32> to vector<2x8x32xf32>
      %209 = arith.subf %188, %208 : vector<2x8x32xf32>
      %cst_96 = arith.constant 9.99999974E-6 : f32
      %210 = vector.broadcast %cst_96 : f32 to vector<2x8x1xf32>
      %211 = arith.addf %207, %210 : vector<2x8x1xf32>
      %212 = math.rsqrt %211 : vector<2x8x1xf32>
      %213 = vector.broadcast %212 : vector<2x8x1xf32> to vector<2x8x32xf32>
      %214 = arith.mulf %209, %213 : vector<2x8x32xf32>
      %215 = vector.broadcast %194 : vector<1x1x32xf32> to vector<2x8x32xf32>
      %216 = arith.mulf %214, %215 : vector<2x8x32xf32>
      %217 = vector.broadcast %196 : vector<1x1x32xf32> to vector<2x8x32xf32>
      %218 = arith.addf %216, %217 : vector<2x8x32xf32>
      %c0_97 = arith.constant 0 : index
      %c0_98 = arith.constant 0 : index
      %c0_99 = arith.constant 0 : index
      %219 = vector.load %arg18[%c0_97, %c0_98, %c0_99] : memref<2x8x32xf32, #tpu.memory_space<vmem>>, vector<2x8x32xf32>
      tpu.vector_store %arg18[%c0_97, %c0_98, %c0_99], %218 {strides = array<i32>} : memref<2x8x32xf32, #tpu.memory_space<vmem>>, vector<2x8x32xf32>,
    } else {
    }
    return
  }
  func.func @transform_0(%arg0: i32, %arg1: i32) -> (i32, i32, i32) {
    %c0_i32 = arith.constant 0 : i32
    %c0_i32_0 = arith.constant 0 : i32
    %c0_i32_1 = arith.constant 0 : i32
    return %arg0, %c0_i32, %c0_i32_0 : i32, i32, i32
  }
  func.func @transform_1(%arg0: i32, %arg1: i32) -> (i32, i32) {
    %c0_i32 = arith.constant 0 : i32
    %c0_i32_0 = arith.constant 0 : i32
    %c0_i32_1 = arith.constant 0 : i32
    return %c0_i32, %c0_i32_0 : i32, i32
  }
  func.func @transform_2(%arg0: i32, %arg1: i32) -> (i32, i32) {
    %c0_i32 = arith.constant 0 : i32
    %c0_i32_0 = arith.constant 0 : i32
    %c0_i32_1 = arith.constant 0 : i32
    return %c0_i32, %c0_i32_0 : i32, i32
  }
  func.func @transform_3(%arg0: i32, %arg1: i32) -> (i32, i32) {
    %c0_i32 = arith.constant 0 : i32
    %c0_i32_0 = arith.constant 0 : i32
    %c0_i32_1 = arith.constant 0 : i32
    return %c0_i32, %c0_i32_0 : i32, i32
  }
  func.func @transform_4(%arg0: i32, %arg1: i32) -> (i32, i32, i32) {
    %c0_i32 = arith.constant 0 : i32
    %c0_i32_0 = arith.constant 0 : i32
    %c0_i32_1 = arith.constant 0 : i32
    return %arg1, %c0_i32, %c0_i32_0 : i32, i32, i32
  }
  func.func @transform_5(%arg0: i32, %arg1: i32) -> (i32, i32, i32) {
    %c0_i32 = arith.constant 0 : i32
    %c0_i32_0 = arith.constant 0 : i32
    %c0_i32_1 = arith.constant 0 : i32
    return %arg1, %c0_i32, %c0_i32_0 : i32, i32, i32
  }
  func.func @transform_6(%arg0: i32, %arg1: i32) -> (i32, i32, i32) {
    %c0_i32 = arith.constant 0 : i32
    %c0_i32_0 = arith.constant 0 : i32
    %c0_i32_1 = arith.constant 0 : i32
    return %arg1, %c0_i32, %c0_i32_0 : i32, i32, i32
  }
  func.func @transform_7(%arg0: i32, %arg1: i32) -> (i32, i32, i32) {
    %c0_i32 = arith.constant 0 : i32
    %c0_i32_0 = arith.constant 0 : i32
    %c0_i32_1 = arith.constant 0 : i32
    return %arg1, %c0_i32, %c0_i32_0 : i32, i32, i32
  }
  func.func @transform_8(%arg0: i32, %arg1: i32) -> (i32, i32, i32) {
    %c0_i32 = arith.constant 0 : i32
    %c0_i32_0 = arith.constant 0 : i32
    %c0_i32_1 = arith.constant 0 : i32
    return %arg1, %c0_i32, %c0_i32_0 : i32, i32, i32
  }
  func.func @transform_9(%arg0: i32, %arg1: i32) -> (i32, i32, i32) {
    %c0_i32 = arith.constant 0 : i32
    %c0_i32_0 = arith.constant 0 : i32
    %c0_i32_1 = arith.constant 0 : i32
    return %arg1, %c0_i32, %c0_i32_0 : i32, i32, i32
  }
  func.func @transform_10(%arg0: i32, %arg1: i32) -> (i32, i32, i32) {
    %c0_i32 = arith.constant 0 : i32
    %c0_i32_0 = arith.constant 0 : i32
    %c0_i32_1 = arith.constant 0 : i32
    return %arg1, %c0_i32, %c0_i32_0 : i32, i32, i32
  }
  func.func @transform_11(%arg0: i32, %arg1: i32) -> (i32, i32, i32) {
    %c0_i32 = arith.constant 0 : i32
    %c0_i32_0 = arith.constant 0 : i32
    %c0_i32_1 = arith.constant 0 : i32
    return %arg1, %c0_i32, %c0_i32_0 : i32, i32, i32
  }
  func.func @transform_12(%arg0: i32, %arg1: i32) -> (i32, i32, i32) {
    %c0_i32 = arith.constant 0 : i32
    %c0_i32_0 = arith.constant 0 : i32
    %c0_i32_1 = arith.constant 0 : i32
    return %arg1, %c0_i32, %c0_i32_0 : i32, i32, i32
  }
  func.func @transform_13(%arg0: i32, %arg1: i32) -> (i32, i32, i32) {
    %c0_i32 = arith.constant 0 : i32
    %c0_i32_0 = arith.constant 0 : i32
    %c0_i32_1 = arith.constant 0 : i32
    return %arg1, %c0_i32, %c0_i32_0 : i32, i32, i32
  }
  func.func @transform_14(%arg0: i32, %arg1: i32) -> (i32, i32, i32) {
    %c0_i32 = arith.constant 0 : i32
    %c0_i32_0 = arith.constant 0 : i32
    %c0_i32_1 = arith.constant 0 : i32
    return %arg1, %c0_i32, %c0_i32_0 : i32, i32, i32
  }
  func.func @transform_15(%arg0: i32, %arg1: i32) -> (i32, i32, i32) {
    %c0_i32 = arith.constant 0 : i32
    %c0_i32_0 = arith.constant 0 : i32
    %c0_i32_1 = arith.constant 0 : i32
    return %arg1, %c0_i32, %c0_i32_0 : i32, i32, i32
  }
  func.func @transform_16(%arg0: i32, %arg1: i32) -> (i32, i32, i32) {
    %c0_i32 = arith.constant 0 : i32
    %c0_i32_0 = arith.constant 0 : i32
    %c0_i32_1 = arith.constant 0 : i32
    return %arg0, %c0_i32, %c0_i32_0 : i32, i32, i32
  }
}

</mosaic_0001>

<llo_original>
// kernel: tpu_custom_call.1
$region0: #{tpu_custom_call.1}
  #allocation0 [shape = 'u32[]', space=smem, size = 0x4, offset = 0x4, fixed_abs, tag = 'smem constant byte address 0x4 - core index']
  #allocation1 [shape = 'u32[144,128]{1,0:T(1,128)}', space=vmem, size = 0x12000, scoped, tag = 'internal scratch']
  #allocation2 [shape = 'f32[2,8,32]{2,1,0:T(8,128)}', space=vmem, size = 0x2000, scoped, tag = 'scratch operand']
  #allocation3 [shape = 'f32[2,8,32]{2,1,0:T(8,128)}', space=vmem, size = 0x2000, scoped, tag = 'scratch operand']
  #allocation4 [shape = 'f32[8,8]{1,0:T(8,128)}', space=vmem, size = 0x1000, scoped, tag = 'scratch operand']
  %s0 = inlined_call_operand.vmem [shape: f32[2,8,32], index: 0, kind: input, shape index: {}]
  %s1 = inlined_call_operand.vmem [shape: f32[8,32], index: 1, kind: input, shape index: {}]
  %s2 = inlined_call_operand.vmem [shape: f32[1,32], index: 2, kind: input, shape index: {}]
  %s3 = inlined_call_operand.vmem [shape: f32[1,32], index: 3, kind: input, shape index: {}]
  %s4 = inlined_call_operand.vmem [shape: f32[2,1,32], index: 4, kind: input, shape index: {}]
  %s5 = inlined_call_operand.vmem [shape: f32[2,1,32], index: 5, kind: input, shape index: {}]
  %s6 = inlined_call_operand.vmem [shape: bf16[2,32,96], index: 6, kind: input, shape index: {}]
  %s7 = inlined_call_operand.vmem [shape: f32[2,1,96], index: 7, kind: input, shape index: {}]
  %s8 = inlined_call_operand.vmem [shape: bf16[2,32,32], index: 8, kind: input, shape index: {}]
  %s9 = inlined_call_operand.vmem [shape: f32[2,1,32], index: 9, kind: input, shape index: {}]
  %s10 = inlined_call_operand.vmem [shape: f32[2,1,32], index: 10, kind: input, shape index: {}]
  %s11 = inlined_call_operand.vmem [shape: f32[2,1,32], index: 11, kind: input, shape index: {}]
  %s12 = inlined_call_operand.vmem [shape: bf16[2,32,128], index: 12, kind: input, shape index: {}]
  %s13 = inlined_call_operand.vmem [shape: f32[2,1,128], index: 13, kind: input, shape index: {}]
  %s14 = inlined_call_operand.vmem [shape: bf16[2,128,32], index: 14, kind: input, shape index: {}]
  %s15 = inlined_call_operand.vmem [shape: f32[2,1,32], index: 15, kind: input, shape index: {}]
  %s16 = inlined_call_operand.hbm [shape: f32[2,8,32], index: 16, kind: output, shape index: {}]
  %s17 = sld [smem:[#allocation0]]
  $region105: #{tpu_custom_call.1} parent=0
    _
  %s19 = ssub.s32 1, %s17
  %s20 = scalar_select 0, %s19, %s17
  $region1: #{tpu_custom_call.1} parent=0
    #allocation5 [shape = 'u8[8192]{0}', space=vmem, size = 0x2000, scoped, tag = 'output window, operand 0, single buffered']
    #allocation6 [shape = 's32[2]{0}', space=sflag, size = 0x8, scoped, tag = 'scoped memory for tpu_custom_call.1']
    %21 = vsyncpa [#allocation6], 0
    loop: start=0, step=1, limit=4
    $region2: #{tpu_custom_call.1} parent=1 // loop_pre_header
      _
    $region3: #{tpu_custom_call.1} parent=1 // loop_header
      %s23 = sphi 0, %s27
      %p24 = scmp.ge.s32.totalorder %s23, 4
      %s30 = sphi 0, %s42
      %s31 = sphi 0, %s38
      %s32 = sphi 0, %s30
      %s33 = sphi 0, %s31
      %s34 = sphi 0, %s32
      %s35 = sphi 0, %s33
      %s45 = sphi 0, %s47
      %s48 = sphi 0, %s45
      %s49 = sphi 0, %s48
      %s65 = sphi 0, %s49
      %s69 = sphi 0, %s69
      %s71 = sphi 0, %s69
      %s72 = sphi 0, %s71
      %s86 = sphi 0, %s72
      %s90 = sphi 0, %s90
      %s92 = sphi 0, %s90
      %s93 = sphi 0, %s92
      %s107 = sphi 0, %s93
      %s111 = sphi 0, %s111
      %s113 = sphi 0, %s111
      %s114 = sphi 0, %s113
      %s128 = sphi 0, %s114
      %s134 = sphi 0, %s136
      %s137 = sphi 0, %s134
      %s138 = sphi 0, %s137
      %s154 = sphi 0, %s138
      %s160 = sphi 0, %s162
      %s163 = sphi 0, %s160
      %s164 = sphi 0, %s163
      %s180 = sphi 0, %s164
      %s186 = sphi 0, %s188
      %s189 = sphi 0, %s186
      %s190 = sphi 0, %s189
      %s206 = sphi 0, %s190
      %s212 = sphi 0, %s214
      %s215 = sphi 0, %s212
      %s216 = sphi 0, %s215
      %s232 = sphi 0, %s216
      %s238 = sphi 0, %s240
      %s241 = sphi 0, %s238
      %s242 = sphi 0, %s241
      %s258 = sphi 0, %s242
      %s264 = sphi 0, %s266
      %s267 = sphi 0, %s264
      %s268 = sphi 0, %s267
      %s284 = sphi 0, %s268
      %s290 = sphi 0, %s292
      %s293 = sphi 0, %s290
      %s294 = sphi 0, %s293
      %s310 = sphi 0, %s294
      %s316 = sphi 0, %s318
      %s319 = sphi 0, %s316
      %s320 = sphi 0, %s319
      %s336 = sphi 0, %s320
      %s342 = sphi 0, %s344
      %s345 = sphi 0, %s342
      %s346 = sphi 0, %s345
      %s362 = sphi 0, %s346
      %s368 = sphi 0, %s370
      %s371 = sphi 0, %s368
      %s372 = sphi 0, %s371
      %s388 = sphi 0, %s372
      %s394 = sphi 0, %s396
      %s397 = sphi 0, %s394
      %s398 = sphi 0, %s397
      %s414 = sphi 0, %s398
      %s420 = sphi 0, %s422
      %s423 = sphi 0, %s420
      %s424 = sphi 0, %s423
      %s440 = sphi 0, %s424
      %s446 = sphi 0, %s448
      %s449 = sphi 0, %s446
      %s450 = sphi 0, %s449
      %s466 = sphi 0, %s450
    $region4: #{tpu_custom_call.1} parent=1 // loop_header_branch
      %26 = sbr.rel (%p24) target = $region8
    $region5: #{tpu_custom_call.1} parent=1 // loop_body
      %s28 = ssub.s32 %s23, 1
      %s29 = ssub.s32 %s23, 2
      %s36 = sadd.s32 1, %s31
      %p37 = scmp.ge.s32.totalorder %s36, 2
      %s38 = scalar_select %p37, 0, %s36
      %s39 = sadd.s32 1, %s30
      %s40 = scalar_select %p37, %s39, %s30
      %p41 = scmp.ge.s32.totalorder %s40, 1
      %s42 = scalar_select %p41, 0, %s40
      %s43 = ssub.s32 %s30, %s42
      %p44 = scmp.eq.s32.totalorder %s43, 0
      %s46 = sadd.s32 %s45, 1
      %s47 = scalar_select %p44, %s45, %s46
      %p50 = pneg %p44
      %p51 = scmp.eq.s32.totalorder %s23, 1
      %p52 = por %p50, %p51
      %p53 = scmp.ne.s32.totalorder %s45, %s48
      %p54 = scmp.eq.s32.totalorder %s23, 0
      %p55 = por %p53, %p54
      %p56 = scmp.ne.s32.totalorder %s45, %s48
      %p57 = scmp.eq.s32.totalorder %s28, 1
      %p58 = por %p56, %p57
      %p59 = scmp.ne.s32.totalorder %s48, %s49
      %p60 = scmp.eq.s32.totalorder %s28, 0
      %p61 = por %p59, %p60
      %p62 = scmp.ne.s32.totalorder %s48, %s49
      %p63 = scmp.eq.s32.totalorder %s29, 1
      %p64 = por %p62, %p63
      %p66 = scmp.ne.s32.totalorder %s49, %s65
      %p67 = scmp.eq.s32.totalorder %s29, 0
      %p68 = por %p66, %p67
      %s70 = sadd.s32 %s69, 1
      %p73 = scmp.eq.s32.totalorder %s23, 1
      %p74 = scmp.ne.s32.totalorder %s69, %s71
      %p75 = scmp.eq.s32.totalorder %s23, 0
      %p76 = por %p74, %p75
      %p77 = scmp.ne.s32.totalorder %s69, %s71
      %p78 = scmp.eq.s32.totalorder %s28, 1
      %p79 = por %p77, %p78
      %p80 = scmp.ne.s32.totalorder %s71, %s72
      %p81 = scmp.eq.s32.totalorder %s28, 0
      %p82 = por %p80, %p81
      %p83 = scmp.ne.s32.totalorder %s71, %s72
      %p84 = scmp.eq.s32.totalorder %s29, 1
      %p85 = por %p83, %p84
      %p87 = scmp.ne.s32.totalorder %s72, %s86
      %p88 = scmp.eq.s32.totalorder %s29, 0
      %p89 = por %p87, %p88
      %s91 = sadd.s32 %s90, 1
      %p94 = scmp.eq.s32.totalorder %s23, 1
      %p95 = scmp.ne.s32.totalorder %s90, %s92
      %p96 = scmp.eq.s32.totalorder %s23, 0
      %p97 = por %p95, %p96
      %p98 = scmp.ne.s32.totalorder %s90, %s92
      %p99 = scmp.eq.s32.totalorder %s28, 1
      %p100 = por %p98, %p99
      %p101 = scmp.ne.s32.totalorder %s92, %s93
      %p102 = scmp.eq.s32.totalorder %s28, 0
      %p103 = por %p101, %p102
      %p104 = scmp.ne.s32.totalorder %s92, %s93
      %p105 = scmp.eq.s32.totalorder %s29, 1
      %p106 = por %p104, %p105
      %p108 = scmp.ne.s32.totalorder %s93, %s107
      %p109 = scmp.eq.s32.totalorder %s29, 0
      %p110 = por %p108, %p109
      %s112 = sadd.s32 %s111, 1
      %p115 = scmp.eq.s32.totalorder %s23, 1
      %p116 = scmp.ne.s32.totalorder %s111, %s113
      %p117 = scmp.eq.s32.totalorder %s23, 0
      %p118 = por %p116, %p117
      %p119 = scmp.ne.s32.totalorder %s111, %s113
      %p120 = scmp.eq.s32.totalorder %s28, 1
      %p121 = por %p119, %p120
      %p122 = scmp.ne.s32.totalorder %s113, %s114
      %p123 = scmp.eq.s32.totalorder %s28, 0
      %p124 = por %p122, %p123
      %p125 = scmp.ne.s32.totalorder %s113, %s114
      %p126 = scmp.eq.s32.totalorder %s29, 1
      %p127 = por %p125, %p126
      %p129 = scmp.ne.s32.totalorder %s114, %s128
      %p130 = scmp.eq.s32.totalorder %s29, 0
      %p131 = por %p129, %p130
      %s132 = ssub.s32 %s31, %s38
      %p133 = scmp.eq.s32.totalorder %s132, 0
      %s135 = sadd.s32 %s134, 1
      %s136 = scalar_select %p133, %s134, %s135
      %p139 = pneg %p133
      %p140 = scmp.eq.s32.totalorder %s23, 1
      %p141 = por %p139, %p140
      %p142 = scmp.ne.s32.totalorder %s134, %s137
      %p143 = scmp.eq.s32.totalorder %s23, 0
      %p144 = por %p142, %p143
      %p145 = scmp.ne.s32.totalorder %s134, %s137
      %p146 = scmp.eq.s32.totalorder %s28, 1
      %p147 = por %p145, %p146
      %p148 = scmp.ne.s32.totalorder %s137, %s138
      %p149 = scmp.eq.s32.totalorder %s28, 0
      %p150 = por %p148, %p149
      %p151 = scmp.ne.s32.totalorder %s137, %s138
      %p152 = scmp.eq.s32.totalorder %s29, 1
      %p153 = por %p151, %p152
      %p155 = scmp.ne.s32.totalorder %s138, %s154
      %p156 = scmp.eq.s32.totalorder %s29, 0
      %p157 = por %p155, %p156
      %s158 = ssub.s32 %s31, %s38
      %p159 = scmp.eq.s32.totalorder %s158, 0
      %s161 = sadd.s32 %s160, 1
      %s162 = scalar_select %p159, %s160, %s161
      %p165 = pneg %p159
      %p166 = scmp.eq.s32.totalorder %s23, 1
      %p167 = por %p165, %p166
      %p168 = scmp.ne.s32.totalorder %s160, %s163
      %p169 = scmp.eq.s32.totalorder %s23, 0
      %p170 = por %p168, %p169
      %p171 = scmp.ne.s32.totalorder %s160, %s163
      %p172 = scmp.eq.s32.totalorder %s28, 1
      %p173 = por %p171, %p172
      %p174 = scmp.ne.s32.totalorder %s163, %s164
      %p175 = scmp.eq.s32.totalorder %s28, 0
      %p176 = por %p174, %p175
      %p177 = scmp.ne.s32.totalorder %s163, %s164
      %p178 = scmp.eq.s32.totalorder %s29, 1
      %p179 = por %p177, %p178
      %p181 = scmp.ne.s32.totalorder %s164, %s180
      %p182 = scmp.eq.s32.totalorder %s29, 0
      %p183 = por %p181, %p182
      %s184 = ssub.s32 %s31, %s38
      %p185 = scmp.eq.s32.totalorder %s184, 0
      %s187 = sadd.s32 %s186, 1
      %s188 = scalar_select %p185, %s186, %s187
      %p191 = pneg %p185
      %p192 = scmp.eq.s32.totalorder %s23, 1
      %p193 = por %p191, %p192
      %p194 = scmp.ne.s32.totalorder %s186, %s189
      %p195 = scmp.eq.s32.totalorder %s23, 0
      %p196 = por %p194, %p195
      %p197 = scmp.ne.s32.totalorder %s186, %s189
      %p198 = scmp.eq.s32.totalorder %s28, 1
      %p199 = por %p197, %p198
      %p200 = scmp.ne.s32.totalorder %s189, %s190
      %p201 = scmp.eq.s32.totalorder %s28, 0
      %p202 = por %p200, %p201
      %p203 = scmp.ne.s32.totalorder %s189, %s190
      %p204 = scmp.eq.s32.totalorder %s29, 1
      %p205 = por %p203, %p204
      %p207 = scmp.ne.s32.totalorder %s190, %s206
      %p208 = scmp.eq.s32.totalorder %s29, 0
      %p209 = por %p207, %p208
      %s210 = ssub.s32 %s31, %s38
      %p211 = scmp.eq.s32.totalorder %s210, 0
      %s213 = sadd.s32 %s212, 1
      %s214 = scalar_select %p211, %s212, %s213
      %p217 = pneg %p211
      %p218 = scmp.eq.s32.totalorder %s23, 1
      %p219 = por %p217, %p218
      %p220 = scmp.ne.s32.totalorder %s212, %s215
      %p221 = scmp.eq.s32.totalorder %s23, 0
      %p222 = por %p220, %p221
      %p223 = scmp.ne.s32.totalorder %s212, %s215
      %p224 = scmp.eq.s32.totalorder %s28, 1
      %p225 = por %p223, %p224
      %p226 = scmp.ne.s32.totalorder %s215, %s216
      %p227 = scmp.eq.s32.totalorder %s28, 0
      %p228 = por %p226, %p227
      %p229 = scmp.ne.s32.totalorder %s215, %s216
      %p230 = scmp.eq.s32.totalorder %s29, 1
      %p231 = por %p229, %p230
      %p233 = scmp.ne.s32.totalorder %s216, %s232
      %p234 = scmp.eq.s32.totalorder %s29, 0
      %p235 = por %p233, %p234
      %s236 = ssub.s32 %s31, %s38
      %p237 = scmp.eq.s32.totalorder %s236, 0
      %s239 = sadd.s32 %s238, 1
      %s240 = scalar_select %p237, %s238, %s239
      %p243 = pneg %p237
      %p244 = scmp.eq.s32.totalorder %s23, 1
      %p245 = por %p243, %p244
      %p246 = scmp.ne.s32.totalorder %s238, %s241
      %p247 = scmp.eq.s32.totalorder %s23, 0
      %p248 = por %p246, %p247
      %p249 = scmp.ne.s32.totalorder %s238, %s241
      %p250 = scmp.eq.s32.totalorder %s28, 1
      %p251 = por %p249, %p250
      %p252 = scmp.ne.s32.totalorder %s241, %s242
      %p253 = scmp.eq.s32.totalorder %s28, 0
      %p254 = por %p252, %p253
      %p255 = scmp.ne.s32.totalorder %s241, %s242
      %p256 = scmp.eq.s32.totalorder %s29, 1
      %p257 = por %p255, %p256
      %p259 = scmp.ne.s32.totalorder %s242, %s258
      %p260 = scmp.eq.s32.totalorder %s29, 0
      %p261 = por %p259, %p260
      %s262 = ssub.s32 %s31, %s38
      %p263 = scmp.eq.s32.totalorder %s262, 0
      %s265 = sadd.s32 %s264, 1
      %s266 = scalar_select %p263, %s264, %s265
      %p269 = pneg %p263
      %p270 = scmp.eq.s32.totalorder %s23, 1
      %p271 = por %p269, %p270
      %p272 = scmp.ne.s32.totalorder %s264, %s267
      %p273 = scmp.eq.s32.totalorder %s23, 0
      %p274 = por %p272, %p273
      %p275 = scmp.ne.s32.totalorder %s264, %s267
      %p276 = scmp.eq.s32.totalorder %s28, 1
      %p277 = por %p275, %p276
      %p278 = scmp.ne.s32.totalorder %s267, %s268
      %p279 = scmp.eq.s32.totalorder %s28, 0
      %p280 = por %p278, %p279
      %p281 = scmp.ne.s32.totalorder %s267, %s268
      %p282 = scmp.eq.s32.totalorder %s29, 1
      %p283 = por %p281, %p282
      %p285 = scmp.ne.s32.totalorder %s268, %s284
      %p286 = scmp.eq.s32.totalorder %s29, 0
      %p287 = por %p285, %p286
      %s288 = ssub.s32 %s31, %s38
      %p289 = scmp.eq.s32.totalorder %s288, 0
      %s291 = sadd.s32 %s290, 1
      %s292 = scalar_select %p289, %s290, %s291
      %p295 = pneg %p289
      %p296 = scmp.eq.s32.totalorder %s23, 1
      %p297 = por %p295, %p296
      %p298 = scmp.ne.s32.totalorder %s290, %s293
      %p299 = scmp.eq.s32.totalorder %s23, 0
      %p300 = por %p298, %p299
      %p301 = scmp.ne.s32.totalorder %s290, %s293
      %p302 = scmp.eq.s32.totalorder %s28, 1
      %p303 = por %p301, %p302
      %p304 = scmp.ne.s32.totalorder %s293, %s294
      %p305 = scmp.eq.s32.totalorder %s28, 0
      %p306 = por %p304, %p305
      %p307 = scmp.ne.s32.totalorder %s293, %s294
      %p308 = scmp.eq.s32.totalorder %s29, 1
      %p309 = por %p307, %p308
      %p311 = scmp.ne.s32.totalorder %s294, %s310
      %p312 = scmp.eq.s32.totalorder %s29, 0
      %p313 = por %p311, %p312
      %s314 = ssub.s32 %s31, %s38
      %p315 = scmp.eq.s32.totalorder %s314, 0
      %s317 = sadd.s32 %s316, 1
      %s318 = scalar_select %p315, %s316, %s317
      %p321 = pneg %p315
      %p322 = scmp.eq.s32.totalorder %s23, 1
      %p323 = por %p321, %p322
      %p324 = scmp.ne.s32.totalorder %s316, %s319
      %p325 = scmp.eq.s32.totalorder %s23, 0
      %p326 = por %p324, %p325
      %p327 = scmp.ne.s32.totalorder %s316, %s319
      %p328 = scmp.eq.s32.totalorder %s28, 1
      %p329 = por %p327, %p328
      %p330 = scmp.ne.s32.totalorder %s319, %s320
      %p331 = scmp.eq.s32.totalorder %s28, 0
      %p332 = por %p330, %p331
      %p333 = scmp.ne.s32.totalorder %s319, %s320
      %p334 = scmp.eq.s32.totalorder %s29, 1
      %p335 = por %p333, %p334
      %p337 = scmp.ne.s32.totalorder %s320, %s336
      %p338 = scmp.eq.s32.totalorder %s29, 0
      %p339 = por %p337, %p338
      %s340 = ssub.s32 %s31, %s38
      %p341 = scmp.eq.s32.totalorder %s340, 0
      %s343 = sadd.s32 %s342, 1
      %s344 = scalar_select %p341, %s342, %s343
      %p347 = pneg %p341
      %p348 = scmp.eq.s32.totalorder %s23, 1
      %p349 = por %p347, %p348
      %p350 = scmp.ne.s32.totalorder %s342, %s345
      %p351 = scmp.eq.s32.totalorder %s23, 0
      %p352 = por %p350, %p351
      %p353 = scmp.ne.s32.totalorder %s342, %s345
      %p354 = scmp.eq.s32.totalorder %s28, 1
      %p355 = por %p353, %p354
      %p356 = scmp.ne.s32.totalorder %s345, %s346
      %p357 = scmp.eq.s32.totalorder %s28, 0
      %p358 = por %p356, %p357
      %p359 = scmp.ne.s32.totalorder %s345, %s346
      %p360 = scmp.eq.s32.totalorder %s29, 1
      %p361 = por %p359, %p360
      %p363 = scmp.ne.s32.totalorder %s346, %s362
      %p364 = scmp.eq.s32.totalorder %s29, 0
      %p365 = por %p363, %p364
      %s366 = ssub.s32 %s31, %s38
      %p367 = scmp.eq.s32.totalorder %s366, 0
      %s369 = sadd.s32 %s368, 1
      %s370 = scalar_select %p367, %s368, %s369
      %p373 = pneg %p367
      %p374 = scmp.eq.s32.totalorder %s23, 1
      %p375 = por %p373, %p374
      %p376 = scmp.ne.s32.totalorder %s368, %s371
      %p377 = scmp.eq.s32.totalorder %s23, 0
      %p378 = por %p376, %p377
      %p379 = scmp.ne.s32.totalorder %s368, %s371
      %p380 = scmp.eq.s32.totalorder %s28, 1
      %p381 = por %p379, %p380
      %p382 = scmp.ne.s32.totalorder %s371, %s372
      %p383 = scmp.eq.s32.totalorder %s28, 0
      %p384 = por %p382, %p383
      %p385 = scmp.ne.s32.totalorder %s371, %s372
      %p386 = scmp.eq.s32.totalorder %s29, 1
      %p387 = por %p385, %p386
      %p389 = scmp.ne.s32.totalorder %s372, %s388
      %p390 = scmp.eq.s32.totalorder %s29, 0
      %p391 = por %p389, %p390
      %s392 = ssub.s32 %s31, %s38
      %p393 = scmp.eq.s32.totalorder %s392, 0
      %s395 = sadd.s32 %s394, 1
      %s396 = scalar_select %p393, %s394, %s395
      %p399 = pneg %p393
      %p400 = scmp.eq.s32.totalorder %s23, 1
      %p401 = por %p399, %p400
      %p402 = scmp.ne.s32.totalorder %s394, %s397
      %p403 = scmp.eq.s32.totalorder %s23, 0
      %p404 = por %p402, %p403
      %p405 = scmp.ne.s32.totalorder %s394, %s397
      %p406 = scmp.eq.s32.totalorder %s28, 1
      %p407 = por %p405, %p406
      %p408 = scmp.ne.s32.totalorder %s397, %s398
      %p409 = scmp.eq.s32.totalorder %s28, 0
      %p410 = por %p408, %p409
      %p411 = scmp.ne.s32.totalorder %s397, %s398
      %p412 = scmp.eq.s32.totalorder %s29, 1
      %p413 = por %p411, %p412
      %p415 = scmp.ne.s32.totalorder %s398, %s414
      %p416 = scmp.eq.s32.totalorder %s29, 0
      %p417 = por %p415, %p416
      %s418 = ssub.s32 %s31, %s38
      %p419 = scmp.eq.s32.totalorder %s418, 0
      %s421 = sadd.s32 %s420, 1
      %s422 = scalar_select %p419, %s420, %s421
      %p425 = pneg %p419
      %p426 = scmp.eq.s32.totalorder %s23, 1
      %p427 = por %p425, %p426
      %p428 = scmp.ne.s32.totalorder %s420, %s423
      %p429 = scmp.eq.s32.totalorder %s23, 0
      %p430 = por %p428, %p429
      %p431 = scmp.ne.s32.totalorder %s420, %s423
      %p432 = scmp.eq.s32.totalorder %s28, 1
      %p433 = por %p431, %p432
      %p434 = scmp.ne.s32.totalorder %s423, %s424
      %p435 = scmp.eq.s32.totalorder %s28, 0
      %p436 = por %p434, %p435
      %p437 = scmp.ne.s32.totalorder %s423, %s424
      %p438 = scmp.eq.s32.totalorder %s29, 1
      %p439 = por %p437, %p438
      %p441 = scmp.ne.s32.totalorder %s424, %s440
      %p442 = scmp.eq.s32.totalorder %s29, 0
      %p443 = por %p441, %p442
      %s444 = ssub.s32 %s30, %s42
      %p445 = scmp.eq.s32.totalorder %s444, 0
      %s447 = sadd.s32 %s446, 1
      %s448 = scalar_select %p445, %s446, %s447
      %p451 = pneg %p445
      %p452 = scmp.eq.s32.totalorder %s23, 1
      %p453 = por %p451, %p452
      %p454 = scmp.ne.s32.totalorder %s446, %s449
      %p455 = scmp.eq.s32.totalorder %s23, 0
      %p456 = por %p454, %p455
      %p457 = scmp.ne.s32.totalorder %s446, %s449
      %p458 = scmp.eq.s32.totalorder %s28, 1
      %p459 = por %p457, %p458
      %p460 = scmp.ne.s32.totalorder %s449, %s450
      %p461 = scmp.eq.s32.totalorder %s28, 0
      %p462 = por %p460, %p461
      %p463 = scmp.ne.s32.totalorder %s449, %s450
      %p464 = scmp.eq.s32.totalorder %s29, 1
      %p465 = por %p463, %p464
      %p467 = scmp.ne.s32.totalorder %s450, %s466
      %p468 = scmp.eq.s32.totalorder %s29, 0
      %p469 = por %p467, %p468
      %p470 = scmp.le.s32.totalorder 1, %s23
      %p471 = scmp.lt.s32.totalorder %s23, 3
      %p472 = pnand %p470, %p471
      %p473 = pneg %p472
      // Predicated region
      $region9: #{tpu_custom_call.1} parent=5 // pred_check
        _
      $region10: #{tpu_custom_call.1} parent=5 // pred_check_branch
        %475 = sbr.rel (%p472) target = $region12
      $region11: #{tpu_custom_call.1} parent=5 // pred_region
        %s476 = ssub.s32 %s23, 1
        // Predicated region
        $region13: #{tpu_custom_call.1} parent=11 // pred_check
          %p477 = pneg %p61
        $region14: #{tpu_custom_call.1} parent=11 // pred_check_branch
          %479 = sbr.rel (%p477) target = $region16
        $region15: #{tpu_custom_call.1} parent=11 // pred_region
          %s480 = smul.u32 2, %s32
          %p481 = scmp.lt.s32.totalorder %s480, 1
          %s482 = scalar_select %p481, %s480, 1
          %s483 = smul.addr %s482, 8
          %s484 = scalar_lea.vmem %s0, %s483
          %s485 = smul.u32 2, %s32
        $region16: #{tpu_custom_call.1} parent=11 // pred_fallthru
          _
        // Predicated region
        $region17: #{tpu_custom_call.1} parent=11 // pred_check
          %p486 = pneg %p82
        $region18: #{tpu_custom_call.1} parent=11 // pred_check_branch
          %488 = sbr.rel (%p486) target = $region20
        $region19: #{tpu_custom_call.1} parent=11 // pred_region
          _
        $region20: #{tpu_custom_call.1} parent=11 // pred_fallthru
          _
        // Predicated region
        $region21: #{tpu_custom_call.1} parent=11 // pred_check
          %p489 = pneg %p103
        $region22: #{tpu_custom_call.1} parent=11 // pred_check_branch
          %491 = sbr.rel (%p489) target = $region24
        $region23: #{tpu_custom_call.1} parent=11 // pred_region
          _
        $region24: #{tpu_custom_call.1} parent=11 // pred_fallthru
          _
        // Predicated region
        $region25: #{tpu_custom_call.1} parent=11 // pred_check
          %p492 = pneg %p124
        $region26: #{tpu_custom_call.1} parent=11 // pred_check_branch
          %494 = sbr.rel (%p492) target = $region28
        $region27: #{tpu_custom_call.1} parent=11 // pred_region
          _
        $region28: #{tpu_custom_call.1} parent=11 // pred_fallthru
          _
      $region12: #{tpu_custom_call.1} parent=5 // pred_fallthru
        _
      %p495 = scmp.lt.s32.totalorder %s23, 2
      // Predicated region
      $region29: #{tpu_custom_call.1} parent=5 // pred_check
        %p496 = pneg %p495
      $region30: #{tpu_custom_call.1} parent=5 // pred_check_branch
        %498 = sbr.rel (%p496) target = $region32
      $region31: #{tpu_custom_call.1} parent=5 // pred_region
        // Predicated region
        $region33: #{tpu_custom_call.1} parent=31 // pred_check
          %p499 = pneg %p144
        $region34: #{tpu_custom_call.1} parent=31 // pred_check_branch
          %501 = sbr.rel (%p499) target = $region36
        $region35: #{tpu_custom_call.1} parent=31 // pred_region
          %p502 = scmp.lt.s32.totalorder %s31, 1
          %s503 = scalar_select %p502, %s31, 1
          %s504 = scalar_lea.vmem %s4, %s503
        $region36: #{tpu_custom_call.1} parent=31 // pred_fallthru
          _
        // Predicated region
        $region37: #{tpu_custom_call.1} parent=31 // pred_check
          %p505 = pneg %p170
        $region38: #{tpu_custom_call.1} parent=31 // pred_check_branch
          %507 = sbr.rel (%p505) target = $region40
        $region39: #{tpu_custom_call.1} parent=31 // pred_region
          %p508 = scmp.lt.s32.totalorder %s31, 1
          %s509 = scalar_select %p508, %s31, 1
          %s510 = scalar_lea.vmem %s5, %s509
        $region40: #{tpu_custom_call.1} parent=31 // pred_fallthru
          _
        // Predicated region
        $region41: #{tpu_custom_call.1} parent=31 // pred_check
          %p511 = pneg %p196
        $region42: #{tpu_custom_call.1} parent=31 // pred_check_branch
          %513 = sbr.rel (%p511) target = $region44
        $region43: #{tpu_custom_call.1} parent=31 // pred_region
          %p514 = scmp.lt.s32.totalorder %s31, 1
          %s515 = scalar_select %p514, %s31, 1
          %s516 = smul.addr %s515, 4
          %s517 = smul.addr %s516, 4
          %s518 = scalar_lea.vmem %s6, %s517
        $region44: #{tpu_custom_call.1} parent=31 // pred_fallthru
          _
        // Predicated region
        $region45: #{tpu_custom_call.1} parent=31 // pred_check
          %p519 = pneg %p222
        $region46: #{tpu_custom_call.1} parent=31 // pred_check_branch
          %521 = sbr.rel (%p519) target = $region48
        $region47: #{tpu_custom_call.1} parent=31 // pred_region
          %p522 = scmp.lt.s32.totalorder %s31, 1
          %s523 = scalar_select %p522, %s31, 1
          %s524 = scalar_lea.vmem %s7, %s523
        $region48: #{tpu_custom_call.1} parent=31 // pred_fallthru
          _
        // Predicated region
        $region49: #{tpu_custom_call.1} parent=31 // pred_check
          %p525 = pneg %p248
        $region50: #{tpu_custom_call.1} parent=31 // pred_check_branch
          %527 = sbr.rel (%p525) target = $region52
        $region51: #{tpu_custom_call.1} parent=31 // pred_region
          %p528 = scmp.lt.s32.totalorder %s31, 1
          %s529 = scalar_select %p528, %s31, 1
          %s530 = smul.addr %s529, 4
          %s531 = smul.addr %s530, 4
          %s532 = scalar_lea.vmem %s8, %s531
        $region52: #{tpu_custom_call.1} parent=31 // pred_fallthru
          _
        // Predicated region
        $region53: #{tpu_custom_call.1} parent=31 // pred_check
          %p533 = pneg %p274
        $region54: #{tpu_custom_call.1} parent=31 // pred_check_branch
          %535 = sbr.rel (%p533) target = $region56
        $region55: #{tpu_custom_call.1} parent=31 // pred_region
          %p536 = scmp.lt.s32.totalorder %s31, 1
          %s537 = scalar_select %p536, %s31, 1
          %s538 = scalar_lea.vmem %s9, %s537
        $region56: #{tpu_custom_call.1} parent=31 // pred_fallthru
          _
        // Predicated region
        $region57: #{tpu_custom_call.1} parent=31 // pred_check
          %p539 = pneg %p300
        $region58: #{tpu_custom_call.1} parent=31 // pred_check_branch
          %541 = sbr.rel (%p539) target = $region60
        $region59: #{tpu_custom_call.1} parent=31 // pred_region
          %p542 = scmp.lt.s32.totalorder %s31, 1
          %s543 = scalar_select %p542, %s31, 1
          %s544 = scalar_lea.vmem %s10, %s543
        $region60: #{tpu_custom_call.1} parent=31 // pred_fallthru
          _
        // Predicated region
        $region61: #{tpu_custom_call.1} parent=31 // pred_check
          %p545 = pneg %p326
        $region62: #{tpu_custom_call.1} parent=31 // pred_check_branch
          %547 = sbr.rel (%p545) target = $region64
        $region63: #{tpu_custom_call.1} parent=31 // pred_region
          %p548 = scmp.lt.s32.totalorder %s31, 1
          %s549 = scalar_select %p548, %s31, 1
          %s550 = scalar_lea.vmem %s11, %s549
        $region64: #{tpu_custom_call.1} parent=31 // pred_fallthru
          _
        // Predicated region
        $region65: #{tpu_custom_call.1} parent=31 // pred_check
          %p551 = pneg %p352
        $region66: #{tpu_custom_call.1} parent=31 // pred_check_branch
          %553 = sbr.rel (%p551) target = $region68
        $region67: #{tpu_custom_call.1} parent=31 // pred_region
          %p554 = scmp.lt.s32.totalorder %s31, 1
          %s555 = scalar_select %p554, %s31, 1
          %s556 = smul.addr %s555, 4
          %s557 = smul.addr %s556, 4
          %s558 = scalar_lea.vmem %s12, %s557
        $region68: #{tpu_custom_call.1} parent=31 // pred_fallthru
          _
        // Predicated region
        $region69: #{tpu_custom_call.1} parent=31 // pred_check
          %p559 = pneg %p378
        $region70: #{tpu_custom_call.1} parent=31 // pred_check_branch
          %561 = sbr.rel (%p559) target = $region72
        $region71: #{tpu_custom_call.1} parent=31 // pred_region
          %p562 = scmp.lt.s32.totalorder %s31, 1
          %s563 = scalar_select %p562, %s31, 1
          %s564 = scalar_lea.vmem %s13, %s563
        $region72: #{tpu_custom_call.1} parent=31 // pred_fallthru
          _
        // Predicated region
        $region73: #{tpu_custom_call.1} parent=31 // pred_check
          %p565 = pneg %p404
        $region74: #{tpu_custom_call.1} parent=31 // pred_check_branch
          %567 = sbr.rel (%p565) target = $region76
        $region75: #{tpu_custom_call.1} parent=31 // pred_region
          %p568 = scmp.lt.s32.totalorder %s31, 1
          %s569 = scalar_select %p568, %s31, 1
          %s570 = smul.addr %s569, 16
          %s571 = smul.addr %s570, 4
          %s572 = scalar_lea.vmem %s14, %s571
        $region76: #{tpu_custom_call.1} parent=31 // pred_fallthru
          _
        // Predicated region
        $region77: #{tpu_custom_call.1} parent=31 // pred_check
          %p573 = pneg %p430
        $region78: #{tpu_custom_call.1} parent=31 // pred_check_branch
          %575 = sbr.rel (%p573) target = $region80
        $region79: #{tpu_custom_call.1} parent=31 // pred_region
          %p576 = scmp.lt.s32.totalorder %s31, 1
          %s577 = scalar_select %p576, %s31, 1
          %s578 = scalar_lea.vmem %s15, %s577
        $region80: #{tpu_custom_call.1} parent=31 // pred_fallthru
          _
      $region32: #{tpu_custom_call.1} parent=5 // pred_fallthru
        _
      %p579 = scmp.le.s32.totalorder 1, %s23
      %p580 = scmp.lt.s32.totalorder %s23, 3
      %p581 = pnand %p579, %p580
      %p582 = pneg %p581
      // Predicated region
      $region81: #{tpu_custom_call.1} parent=5 // pred_check
        _
      $region82: #{tpu_custom_call.1} parent=5 // pred_check_branch
        %584 = sbr.rel (%p581) target = $region84
      $region83: #{tpu_custom_call.1} parent=5 // pred_region
        %s585 = ssub.s32 %s23, 1
        %s586 = smul.u32 2, %s32
        %p587 = scmp.lt.s32.totalorder %s586, 1
        %s588 = scalar_select %p587, %s586, 1
        %s589 = smul.addr %s588, 8
        %s590 = scalar_lea.vmem %s0, %s589
        %p591 = pneg %p61
        %p592 = pneg %p58
        %p593 = pneg %p82
        %p594 = pneg %p79
        %p595 = pneg %p103
        %p596 = pneg %p100
        %p597 = pneg %p124
        %p598 = pneg %p121
        %p599 = scmp.lt.s32.totalorder %s33, 1
        %s600 = scalar_select %p599, %s33, 1
        %s601 = scalar_lea.vmem %s4, %s600
        %p602 = pneg %p150
        %p603 = pneg %p147
        %p604 = scmp.lt.s32.totalorder %s33, 1
        %s605 = scalar_select %p604, %s33, 1
        %s606 = scalar_lea.vmem %s5, %s605
        %p607 = pneg %p176
        %p608 = pneg %p173
        %p609 = scmp.lt.s32.totalorder %s33, 1
        %s610 = scalar_select %p609, %s33, 1
        %s611 = smul.addr %s610, 4
        %s612 = smul.addr %s611, 4
        %s613 = scalar_lea.vmem %s6, %s612
        %p614 = pneg %p202
        %p615 = pneg %p199
        %p616 = scmp.lt.s32.totalorder %s33, 1
        %s617 = scalar_select %p616, %s33, 1
        %s618 = scalar_lea.vmem %s7, %s617
        %p619 = pneg %p228
        %p620 = pneg %p225
        %p621 = scmp.lt.s32.totalorder %s33, 1
        %s622 = scalar_select %p621, %s33, 1
        %s623 = smul.addr %s622, 4
        %s624 = smul.addr %s623, 4
        %s625 = scalar_lea.vmem %s8, %s624
        %p626 = pneg %p254
        %p627 = pneg %p251
        %p628 = scmp.lt.s32.totalorder %s33, 1
        %s629 = scalar_select %p628, %s33, 1
        %s630 = scalar_lea.vmem %s9, %s629
        %p631 = pneg %p280
        %p632 = pneg %p277
        %p633 = scmp.lt.s32.totalorder %s33, 1
        %s634 = scalar_select %p633, %s33, 1
        %s635 = scalar_lea.vmem %s10, %s634
        %p636 = pneg %p306
        %p637 = pneg %p303
        %p638 = scmp.lt.s32.totalorder %s33, 1
        %s639 = scalar_select %p638, %s33, 1
        %s640 = scalar_lea.vmem %s11, %s639
        %p641 = pneg %p332
        %p642 = pneg %p329
        %p643 = scmp.lt.s32.totalorder %s33, 1
        %s644 = scalar_select %p643, %s33, 1
        %s645 = smul.addr %s644, 4
        %s646 = smul.addr %s645, 4
        %s647 = scalar_lea.vmem %s12, %s646
        %p648 = pneg %p358
        %p649 = pneg %p355
        %p650 = scmp.lt.s32.totalorder %s33, 1
        %s651 = scalar_select %p650, %s33, 1
        %s652 = scalar_lea.vmem %s13, %s651
        %p653 = pneg %p384
        %p654 = pneg %p381
        %p655 = scmp.lt.s32.totalorder %s33, 1
        %s656 = scalar_select %p655, %s33, 1
        %s657 = smul.addr %s656, 16
        %s658 = smul.addr %s657, 4
        %s659 = scalar_lea.vmem %s14, %s658
        %p660 = pneg %p410
        %p661 = pneg %p407
        %p662 = scmp.lt.s32.totalorder %s33, 1
        %s663 = scalar_select %p662, %s33, 1
        %s664 = scalar_lea.vmem %s15, %s663
        %p665 = pneg %p436
        %p666 = pneg %p433
        %p667 = pneg %p462
        %p668 = pneg %p459
        %s669 = smul.u32 2, %s32
        %p670 = scmp.lt.s32.totalorder %s669, 1
        %s671 = scalar_select %p670, %s669, 1
        %s672 = smul.addr %s671, 8
        %s673 = scalar_lea.vmem %s0, %s672
        %s674 = smul.u32 2, %s32
        %p675 = scmp.lt.s32.totalorder %s33, 1
        %s676 = scalar_select %p675, %s33, 1
        %s677 = scalar_lea.vmem %s4, %s676
        %p678 = scmp.lt.s32.totalorder %s33, 1
        %s679 = scalar_select %p678, %s33, 1
        %s680 = scalar_lea.vmem %s5, %s679
        %p681 = scmp.lt.s32.totalorder %s33, 1
        %s682 = scalar_select %p681, %s33, 1
        %s683 = smul.addr %s682, 4
        %s684 = smul.addr %s683, 4
        %s685 = scalar_lea.vmem %s6, %s684
        %p686 = scmp.lt.s32.totalorder %s33, 1
        %s687 = scalar_select %p686, %s33, 1
        %s688 = scalar_lea.vmem %s7, %s687
        %p689 = scmp.lt.s32.totalorder %s33, 1
        %s690 = scalar_select %p689, %s33, 1
        %s691 = smul.addr %s690, 4
        %s692 = smul.addr %s691, 4
        %s693 = scalar_lea.vmem %s8, %s692
        %p694 = scmp.lt.s32.totalorder %s33, 1
        %s695 = scalar_select %p694, %s33, 1
        %s696 = scalar_lea.vmem %s9, %s695
        %p697 = scmp.lt.s32.totalorder %s33, 1
        %s698 = scalar_select %p697, %s33, 1
        %s699 = scalar_lea.vmem %s10, %s698
        %p700 = scmp.lt.s32.totalorder %s33, 1
        %s701 = scalar_select %p700, %s33, 1
        %s702 = scalar_lea.vmem %s11, %s701
        %p703 = scmp.lt.s32.totalorder %s33, 1
        %s704 = scalar_select %p703, %s33, 1
        %s705 = smul.addr %s704, 4
        %s706 = smul.addr %s705, 4
        %s707 = scalar_lea.vmem %s12, %s706
        %p708 = scmp.lt.s32.totalorder %s33, 1
        %s709 = scalar_select %p708, %s33, 1
        %s710 = scalar_lea.vmem %s13, %s709
        %p711 = scmp.lt.s32.totalorder %s33, 1
        %s712 = scalar_select %p711, %s33, 1
        %s713 = smul.addr %s712, 16
        %s714 = smul.addr %s713, 4
        %s715 = scalar_lea.vmem %s14, %s714
        %p716 = scmp.lt.s32.totalorder %s33, 1
        %s717 = scalar_select %p716, %s33, 1
        %s718 = scalar_lea.vmem %s15, %s717
        %s719 = smul.u32 2, %s32
        %p721 = scmp.eq.s32.totalorder %s33, 0
        // Predicated region
        $region85: #{tpu_custom_call.1} parent=83 // pred_check
          %p722 = pneg %p721
        $region86: #{tpu_custom_call.1} parent=83 // pred_check_branch
          %724 = sbr.rel (%p722) target = $region88
        $region87: #{tpu_custom_call.1} parent=83 // pred_region
          %v725 = vld [vmem:[%s673] sm:$0xff]
          %v726 = vld [vmem:[%s673 + $0x8] sm:$0xff]
          %v727 = vld [vmem:[%s1] sm:$0xff]
          %v728 = vadd.f32 %v725, %v727
          %v729 = vadd.f32 %v726, %v727
          %vm730 = vcmask 261120
          %731 = vst.msk [vmem:[#allocation2] sm:$0xff] %vm730, %v728
          %732 = vst.msk [vmem:[#allocation2 + $0x8] sm:$0xff] %vm730, %v729
          %v733 = vlaneseq
          %v734 = vshrl.u32 %v733, 7
          %v735 = vlaneseq
          %v736 = vand.u32 %v735, 127
          %vm737 = vcmp.le.s32.totalorder %v736, %v734
          %v738 = vsel %vm737, 0.0, -1e+09
          %vm739 = vcmask 64512
          %740 = vst.msk [vmem:[#allocation4] sm:$0xff] %vm739, %v738
        $region88: #{tpu_custom_call.1} parent=83 // pred_fallthru
          _
        %v741 = vld [vmem:[#allocation2] sm:$0xff]
        %v742 = vld [vmem:[#allocation2 + $0x8] sm:$0xff]
        %v743 = vld [vmem:[#allocation4] sm:$0xff]
        %v744 = vld [vmem:[%s677] sm:$0x1]
        %v745 = vld [vmem:[%s680] sm:$0x1]
        %vm746 = vcmask 261120
        %v747 = vsel %vm746, %v741, 0.0
        %748 = vadd.xlane.f32.xlu0 %v747
        %v749 = vpop.xlane.xlu0 %748
        %v750 = vsel %vm746, %v742, 0.0
        %751 = vadd.xlane.f32.xlu0 %v750
        %v752 = vpop.xlane.xlu0 %751
        %v753 = vrcp.pop 32.0
        %v754 = vmul.f32 %v749, %v753
        %v755 = vmul.f32 %v752, %v753
        %v756 = vsub.f32 %v741, %v754
        %v757 = vsub.f32 %v742, %v755
        %v758 = vmul.f32 %v756, %v756
        %v759 = vmul.f32 %v757, %v757
        %v760 = vsel %vm746, %v758, 0.0
        %761 = vadd.xlane.f32.xlu0 %v760
        %v762 = vpop.xlane.xlu0 %761
        %v763 = vsel %vm746, %v759, 0.0
        %764 = vadd.xlane.f32.xlu0 %v763
        %v765 = vpop.xlane.xlu0 %764
        %v766 = vmul.f32 %v762, %v753
        %v767 = vmul.f32 %v765, %v753
        %v768 = vadd.f32 %v766, 1e-05
        %v769 = vadd.f32 %v767, 1e-05
        %v770 = vrsqrt.pop %v768
        %v771 = vrsqrt.pop %v769
        %v772 = vmul.f32 %v756, %v770
        %v773 = vmul.f32 %v757, %v771
        %v775 = vlaneseq
        %v776 = vshrl.u32 %v775, 7
        %v777 = vsub.s32 0, %v776
        %v778 = vrot.slane %v744, %v777
        %v780 = vmul.f32 %v772, %v778
        %v781 = vmul.f32 %v773, %v778
        %v783 = vlaneseq
        %v784 = vshrl.u32 %v783, 7
        %v785 = vsub.s32 0, %v784
        %v786 = vrot.slane %v745, %v785
        %v788 = vadd.f32 %v780, %v786
        %v789 = vadd.f32 %v781, %v786
        %v790 = vpack.c.bf16 %v788, %v788
        %v791 = vpack.c.bf16 %v789, %v789
        %v792 = vld [vmem:[%s685] sm:$0xf]
        %v793 = vld [vmem:[%s685 + $0x4] sm:$0xf]
        %v794 = vld [vmem:[%s685 + $0x8] sm:$0xf]
        %v795 = vld [vmem:[%s685 + $0xc] sm:$0xf]
        %v796 = vld [vmem:[%s688] sm:$0x1]
        %v798 = vlaneseq
        %v799 = vshrl.u32 %v798, 7
        %v800 = vsub.s32 0, %v799
        %v801 = vrot.slane %v796, %v800
        %v805 = vunpack.c.l.b16 %v790
        %v806 = vunpack.c.l.b16 %v791
        %v807 = vpack.c.b16 %v806, %v805
        %v812 = vunpack.c.l.b16 %v792
        %v813 = vunpack.c.l.b16 %v793
        %v814 = vunpack.c.l.b16 %v794
        %v815 = vunpack.c.l.b16 %v795
        %v816 = vpack.c.b16 %v813, %v812
        %v817 = vpack.c.b16 %v815, %v814
        %v821 = vsel %vm746, %v807, 0
        %823 = vmatprep.subr.bf16.mxu0 0
        %824 = vmatpush1.bf16.msra.mxu0 %v816
        %825 = vmatprep.subr.bf16.mxu0 0
        %826 = vmatpush1.bf16.msra.mxu0 %v817
        %827 = vmatprep.subr.bf16.mxu0 0
        %828 = vmatpush1.bf16.msra.mxu0 0
        %829 = vmatprep.subr.bf16.mxu0 0
        %830 = vmatpush1.bf16.msra.mxu0 0
        %831 = vmatprep.subr.bf16.mxu0 0
        %832 = vmatpush1.bf16.msra.mxu0 0
        %833 = vmatprep.subr.bf16.mxu0 0
        %834 = vmatpush1.bf16.msra.mxu0 0
        %835 = vmatprep.subr.bf16.mxu0 0
        %836 = vmatpush1.bf16.msra.mxu0 0
        %837 = vmatprep.subr.bf16.mxu0 0
        %838 = vmatpush1.bf16.msra.mxu0 0
        %839 = vmatprep.subr.bf16.mxu0 0
        %840 = vmatpush1.bf16.msra.mxu0 0
        %841 = vmatprep.subr.bf16.mxu0 0
        %842 = vmatpush1.bf16.msra.mxu0 0
        %843 = vmatprep.subr.bf16.mxu0 0
        %844 = vmatpush1.bf16.msra.mxu0 0
        %845 = vmatprep.subr.bf16.mxu0 0
        %846 = vmatpush1.bf16.msra.mxu0 0
        %847 = vmatprep.subr.bf16.mxu0 0
        %848 = vmatpush1.bf16.msra.mxu0 0
        %849 = vmatprep.subr.bf16.mxu0 0
        %850 = vmatpush1.bf16.msra.mxu0 0
        %851 = vmatprep.subr.bf16.mxu0 0
        %852 = vmatpush1.bf16.msra.mxu0 0
        %853 = vmatprep.subr.bf16.mxu0 0
        %854 = vmatpush1.bf16.msra.mxu0 0
        %855 = vmatprep.mubr.bf16.mxu0 0
        %856 = vmatmul.mubr.bf16.gmra.mrb[0].mxu0 %v821
        %v857 = vpop.f32.mrb[0].mxu0
        %v858 = vadd.f32 %v801, %v857
        %v859 = vpop.f32.mrb[0].mxu0
        %v860 = vpop.f32.mrb[0].mxu0
        %v861 = vadd.f32 %v801, %v860
        %v862 = vpop.f32.mrb[0].mxu0
        %863 = vdwg.mxu0
        %v864 = vpack.c.bf16 %v858, %v858
        %v865 = vpack.c.bf16 %v861, %v861
        %867 = vrot.lane.b32.xlu0 %v864, 96
        %v868 = vpop.permute.xlu0 %867
        %vm869 = vcmask 64512
        %v871 = vsel %vm869, %v864, 0
        %v874 = vsel %vm869, %v868, 0
        %876 = vmatprep.subr.bf16.mxu0 0
        %877 = vmatpush1.bf16.xpose.msra.mxu0 %v874
        %878 = vmatprep.subr.bf16.mxu0 0
        %879 = vmatpush1.bf16.xpose.msra.mxu0 0
        %880 = vmatprep.subr.bf16.mxu0 0
        %881 = vmatpush1.bf16.xpose.msra.mxu0 0
        %882 = vmatprep.subr.bf16.mxu0 0
        %883 = vmatpush1.bf16.xpose.msra.mxu0 0
        %884 = vmatprep.subr.bf16.mxu0 0
        %885 = vmatpush1.bf16.xpose.msra.mxu0 0
        %886 = vmatprep.subr.bf16.mxu0 0
        %887 = vmatpush1.bf16.xpose.msra.mxu0 0
        %888 = vmatprep.subr.bf16.mxu0 0
        %889 = vmatpush1.bf16.xpose.msra.mxu0 0
        %890 = vmatprep.subr.bf16.mxu0 0
        %891 = vmatpush1.bf16.xpose.msra.mxu0 0
        %892 = vmatprep.subr.bf16.mxu0 0
        %893 = vmatpush1.bf16.xpose.msra.mxu0 0
        %894 = vmatprep.subr.bf16.mxu0 0
        %895 = vmatpush1.bf16.xpose.msra.mxu0 0
        %896 = vmatprep.subr.bf16.mxu0 0
        %897 = vmatpush1.bf16.xpose.msra.mxu0 0
        %898 = vmatprep.subr.bf16.mxu0 0
        %899 = vmatpush1.bf16.xpose.msra.mxu0 0
        %900 = vmatprep.subr.bf16.mxu0 0
        %901 = vmatpush1.bf16.xpose.msra.mxu0 0
        %902 = vmatprep.subr.bf16.mxu0 0
        %903 = vmatpush1.bf16.xpose.msra.mxu0 0
        %904 = vmatprep.subr.bf16.mxu0 0
        %905 = vmatpush1.bf16.xpose.msra.mxu0 0
        %906 = vmatprep.subr.bf16.mxu0 0
        %907 = vmatpush1.bf16.xpose.msra.mxu0 0
        %908 = vmatprep.mubr.bf16.mxu0 0
        %909 = vmatmul.mubr.bf16.gmra.mrb[0].mxu0 %v871
        %v910 = vpop.f32.mrb[0].mxu0
        %v911 = vadd.f32 %v743, %v910
        %v912 = vpop.f32.mrb[0].mxu0
        %v913 = vpop.f32.mrb[0].mxu0
        %v914 = vpop.f32.mrb[0].mxu0
        %915 = vdwg.mxu0
        %917 = vrot.lane.b32.xlu0 %v865, 96
        %v918 = vpop.permute.xlu0 %917
        %v920 = vsel %vm869, %v865, 0
        %v923 = vsel %vm869, %v918, 0
        %925 = vmatprep.subr.bf16.mxu0 0
        %926 = vmatpush1.bf16.xpose.msra.mxu0 %v923
        %927 = vmatprep.subr.bf16.mxu0 0
        %928 = vmatpush1.bf16.xpose.msra.mxu0 0
        %929 = vmatprep.subr.bf16.mxu0 0
        %930 = vmatpush1.bf16.xpose.msra.mxu0 0
        %931 = vmatprep.subr.bf16.mxu0 0
        %932 = vmatpush1.bf16.xpose.msra.mxu0 0
        %933 = vmatprep.subr.bf16.mxu0 0
        %934 = vmatpush1.bf16.xpose.msra.mxu0 0
        %935 = vmatprep.subr.bf16.mxu0 0
        %936 = vmatpush1.bf16.xpose.msra.mxu0 0
        %937 = vmatprep.subr.bf16.mxu0 0
        %938 = vmatpush1.bf16.xpose.msra.mxu0 0
        %939 = vmatprep.subr.bf16.mxu0 0
        %940 = vmatpush1.bf16.xpose.msra.mxu0 0
        %941 = vmatprep.subr.bf16.mxu0 0
        %942 = vmatpush1.bf16.xpose.msra.mxu0 0
        %943 = vmatprep.subr.bf16.mxu0 0
        %944 = vmatpush1.bf16.xpose.msra.mxu0 0
        %945 = vmatprep.subr.bf16.mxu0 0
        %946 = vmatpush1.bf16.xpose.msra.mxu0 0
        %947 = vmatprep.subr.bf16.mxu0 0
        %948 = vmatpush1.bf16.xpose.msra.mxu0 0
        %949 = vmatprep.subr.bf16.mxu0 0
        %950 = vmatpush1.bf16.xpose.msra.mxu0 0
        %951 = vmatprep.subr.bf16.mxu0 0
        %952 = vmatpush1.bf16.xpose.msra.mxu0 0
        %953 = vmatprep.subr.bf16.mxu0 0
        %954 = vmatpush1.bf16.xpose.msra.mxu0 0
        %955 = vmatprep.subr.bf16.mxu0 0
        %956 = vmatpush1.bf16.xpose.msra.mxu0 0
        %957 = vmatprep.mubr.bf16.mxu0 0
        %958 = vmatmul.mubr.bf16.gmra.mrb[0].mxu0 %v920
        %v959 = vpop.f32.mrb[0].mxu0
        %v960 = vadd.f32 %v743, %v959
        %v961 = vpop.f32.mrb[0].mxu0
        %v962 = vpop.f32.mrb[0].mxu0
        %v963 = vpop.f32.mrb[0].mxu0
        %964 = vdwg.mxu0
        %v965 = vsel %vm869, %v911, -inf
        %966 = vmax.xlane.f32.xlu0 %v965
        %v967 = vpop.xlane.xlu0 %966
        %v968 = vsel %vm869, %v960, -inf
        %969 = vmax.xlane.f32.xlu0 %v968
        %v970 = vpop.xlane.xlu0 %969
        %v971 = vsub.f32 %v911, %v967
        %v972 = vsub.f32 %v960, %v970
        %v973 = vmul.f32 %v971, 1.442695
        %v974 = vpow.pop %v973
        %v975 = vmul.f32 %v972, 1.442695
        %v976 = vpow.pop %v975
        %v977 = vsel %vm869, %v974, 0.0
        %978 = vadd.xlane.f32.xlu0 %v977
        %v979 = vpop.xlane.xlu0 %978
        %v980 = vsel %vm869, %v976, 0.0
        %981 = vadd.xlane.f32.xlu0 %v980
        %v982 = vpop.xlane.xlu0 %981
        %v983 = vrcp.pop %v979
        %v984 = vrcp.pop %v982
        %v985 = vmul.f32 %v974, %v983
        %v986 = vmul.f32 %v976, %v984
        %v987 = vpack.c.bf16 %v985, %v985
        %v988 = vpack.c.bf16 %v986, %v986
        %989 = vrot.lane.b32.xlu0 %v864, 64
        %v990 = vpop.permute.xlu0 %989
        %v992 = vsel %vm869, %v987, 0
        %vm994 = vcmask 1043456
        %v996 = vsel %vm994, %v990, 0
        %998 = vmatprep.subr.bf16.mxu0 0
        %999 = vmatpush1.bf16.msra.mxu0 %v996
        %1000 = vmatprep.subr.bf16.mxu0 0
        %1001 = vmatpush1.bf16.msra.mxu0 0
        %1002 = vmatprep.subr.bf16.mxu0 0
        %1003 = vmatpush1.bf16.msra.mxu0 0
        %1004 = vmatprep.subr.bf16.mxu0 0
        %1005 = vmatpush1.bf16.msra.mxu0 0
        %1006 = vmatprep.subr.bf16.mxu0 0
        %1007 = vmatpush1.bf16.msra.mxu0 0
        %1008 = vmatprep.subr.bf16.mxu0 0
        %1009 = vmatpush1.bf16.msra.mxu0 0
        %1010 = vmatprep.subr.bf16.mxu0 0
        %1011 = vmatpush1.bf16.msra.mxu0 0
        %1012 = vmatprep.subr.bf16.mxu0 0
        %1013 = vmatpush1.bf16.msra.mxu0 0
        %1014 = vmatprep.subr.bf16.mxu0 0
        %1015 = vmatpush1.bf16.msra.mxu0 0
        %1016 = vmatprep.subr.bf16.mxu0 0
        %1017 = vmatpush1.bf16.msra.mxu0 0
        %1018 = vmatprep.subr.bf16.mxu0 0
        %1019 = vmatpush1.bf16.msra.mxu0 0
        %1020 = vmatprep.subr.bf16.mxu0 0
        %1021 = vmatpush1.bf16.msra.mxu0 0
        %1022 = vmatprep.subr.bf16.mxu0 0
        %1023 = vmatpush1.bf16.msra.mxu0 0
        %1024 = vmatprep.subr.bf16.mxu0 0
        %1025 = vmatpush1.bf16.msra.mxu0 0
        %1026 = vmatprep.subr.bf16.mxu0 0
        %1027 = vmatpush1.bf16.msra.mxu0 0
        %1028 = vmatprep.subr.bf16.mxu0 0
        %1029 = vmatpush1.bf16.msra.mxu0 0
        %1030 = vmatprep.mubr.bf16.mxu0 0
        %1031 = vmatmul.mubr.bf16.gmra.mrb[0].mxu0 %v992
        %v1032 = vpop.f32.mrb[0].mxu0
        %v1033 = vadd.f32 0.0, %v1032
        %v1034 = vpop.f32.mrb[0].mxu0
        %v1035 = vpop.f32.mrb[0].mxu0
        %v1036 = vpop.f32.mrb[0].mxu0
        %1037 = vdwg.mxu0
        %1038 = vrot.lane.b32.xlu0 %v865, 64
        %v1039 = vpop.permute.xlu0 %1038
        %v1041 = vsel %vm869, %v988, 0
        %v1044 = vsel %vm994, %v1039, 0
        %1046 = vmatprep.subr.bf16.mxu0 0
        %1047 = vmatpush1.bf16.msra.mxu0 %v1044
        %1048 = vmatprep.subr.bf16.mxu0 0
        %1049 = vmatpush1.bf16.msra.mxu0 0
        %1050 = vmatprep.subr.bf16.mxu0 0
        %1051 = vmatpush1.bf16.msra.mxu0 0
        %1052 = vmatprep.subr.bf16.mxu0 0
        %1053 = vmatpush1.bf16.msra.mxu0 0
        %1054 = vmatprep.subr.bf16.mxu0 0
        %1055 = vmatpush1.bf16.msra.mxu0 0
        %1056 = vmatprep.subr.bf16.mxu0 0
        %1057 = vmatpush1.bf16.msra.mxu0 0
        %1058 = vmatprep.subr.bf16.mxu0 0
        %1059 = vmatpush1.bf16.msra.mxu0 0
        %1060 = vmatprep.subr.bf16.mxu0 0
        %1061 = vmatpush1.bf16.msra.mxu0 0
        %1062 = vmatprep.subr.bf16.mxu0 0
        %1063 = vmatpush1.bf16.msra.mxu0 0
        %1064 = vmatprep.subr.bf16.mxu0 0
        %1065 = vmatpush1.bf16.msra.mxu0 0
        %1066 = vmatprep.subr.bf16.mxu0 0
        %1067 = vmatpush1.bf16.msra.mxu0 0
        %1068 = vmatprep.subr.bf16.mxu0 0
        %1069 = vmatpush1.bf16.msra.mxu0 0
        %1070 = vmatprep.subr.bf16.mxu0 0
        %1071 = vmatpush1.bf16.msra.mxu0 0
        %1072 = vmatprep.subr.bf16.mxu0 0
        %1073 = vmatpush1.bf16.msra.mxu0 0
        %1074 = vmatprep.subr.bf16.mxu0 0
        %1075 = vmatpush1.bf16.msra.mxu0 0
        %1076 = vmatprep.subr.bf16.mxu0 0
        %1077 = vmatpush1.bf16.msra.mxu0 0
        %1078 = vmatprep.mubr.bf16.mxu0 0
        %1079 = vmatmul.mubr.bf16.gmra.mrb[0].mxu0 %v1041
        %v1080 = vpop.f32.mrb[0].mxu0
        %v1081 = vadd.f32 0.0, %v1080
        %v1082 = vpop.f32.mrb[0].mxu0
        %v1083 = vpop.f32.mrb[0].mxu0
        %v1084 = vpop.f32.mrb[0].mxu0
        %1085 = vdwg.mxu0
        %1086 = vst.msk [vmem:[#allocation3] sm:$0xff] %vm869, %v1033
        %1087 = vst.msk [vmem:[#allocation3 + $0x8] sm:$0xff] %vm869, %v1081
        %1088 = vrot.lane.b32.xlu0 %v864, 120
        %v1089 = vpop.permute.xlu0 %1088
        %1090 = vrot.lane.b32.xlu0 %v864, 88
        %v1091 = vpop.permute.xlu0 %1090
        %v1093 = vsel %vm869, %v1089, 0
        %v1096 = vsel %vm869, %v1091, 0
        %1098 = vmatprep.subr.bf16.mxu0 0
        %1099 = vmatpush1.bf16.xpose.msra.mxu0 %v1096
        %1100 = vmatprep.subr.bf16.mxu0 0
        %1101 = vmatpush1.bf16.xpose.msra.mxu0 0
        %1102 = vmatprep.subr.bf16.mxu0 0
        %1103 = vmatpush1.bf16.xpose.msra.mxu0 0
        %1104 = vmatprep.subr.bf16.mxu0 0
        %1105 = vmatpush1.bf16.xpose.msra.mxu0 0
        %1106 = vmatprep.subr.bf16.mxu0 0
        %1107 = vmatpush1.bf16.xpose.msra.mxu0 0
        %1108 = vmatprep.subr.bf16.mxu0 0
        %1109 = vmatpush1.bf16.xpose.msra.mxu0 0
        %1110 = vmatprep.subr.bf16.mxu0 0
        %1111 = vmatpush1.bf16.xpose.msra.mxu0 0
        %1112 = vmatprep.subr.bf16.mxu0 0
        %1113 = vmatpush1.bf16.xpose.msra.mxu0 0
        %1114 = vmatprep.subr.bf16.mxu0 0
        %1115 = vmatpush1.bf16.xpose.msra.mxu0 0
        %1116 = vmatprep.subr.bf16.mxu0 0
        %1117 = vmatpush1.bf16.xpose.msra.mxu0 0
        %1118 = vmatprep.subr.bf16.mxu0 0
        %1119 = vmatpush1.bf16.xpose.msra.mxu0 0
        %1120 = vmatprep.subr.bf16.mxu0 0
        %1121 = vmatpush1.bf16.xpose.msra.mxu0 0
        %1122 = vmatprep.subr.bf16.mxu0 0
        %1123 = vmatpush1.bf16.xpose.msra.mxu0 0
        %1124 = vmatprep.subr.bf16.mxu0 0
        %1125 = vmatpush1.bf16.xpose.msra.mxu0 0
        %1126 = vmatprep.subr.bf16.mxu0 0
        %1127 = vmatpush1.bf16.xpose.msra.mxu0 0
        %1128 = vmatprep.subr.bf16.mxu0 0
        %1129 = vmatpush1.bf16.xpose.msra.mxu0 0
        %1130 = vmatprep.mubr.bf16.mxu0 0
        %1131 = vmatmul.mubr.bf16.gmra.mrb[0].mxu0 %v1093
        %v1132 = vpop.f32.mrb[0].mxu0
        %v1133 = vadd.f32 %v743, %v1132
        %v1134 = vpop.f32.mrb[0].mxu0
        %v1135 = vpop.f32.mrb[0].mxu0
        %v1136 = vpop.f32.mrb[0].mxu0
        %1137 = vdwg.mxu0
        %1138 = vrot.lane.b32.xlu0 %v865, 120
        %v1139 = vpop.permute.xlu0 %1138
        %1140 = vrot.lane.b32.xlu0 %v865, 88
        %v1141 = vpop.permute.xlu0 %1140
        %v1143 = vsel %vm869, %v1139, 0
        %v1146 = vsel %vm869, %v1141, 0
        %1148 = vmatprep.subr.bf16.mxu0 0
        %1149 = vmatpush1.bf16.xpose.msra.mxu0 %v1146
        %1150 = vmatprep.subr.bf16.mxu0 0
        %1151 = vmatpush1.bf16.xpose.msra.mxu0 0
        %1152 = vmatprep.subr.bf16.mxu0 0
        %1153 = vmatpush1.bf16.xpose.msra.mxu0 0
        %1154 = vmatprep.subr.bf16.mxu0 0
        %1155 = vmatpush1.bf16.xpose.msra.mxu0 0
        %1156 = vmatprep.subr.bf16.mxu0 0
        %1157 = vmatpush1.bf16.xpose.msra.mxu0 0
        %1158 = vmatprep.subr.bf16.mxu0 0
        %1159 = vmatpush1.bf16.xpose.msra.mxu0 0
        %1160 = vmatprep.subr.bf16.mxu0 0
        %1161 = vmatpush1.bf16.xpose.msra.mxu0 0
        %1162 = vmatprep.subr.bf16.mxu0 0
        %1163 = vmatpush1.bf16.xpose.msra.mxu0 0
        %1164 = vmatprep.subr.bf16.mxu0 0
        %1165 = vmatpush1.bf16.xpose.msra.mxu0 0
        %1166 = vmatprep.subr.bf16.mxu0 0
        %1167 = vmatpush1.bf16.xpose.msra.mxu0 0
        %1168 = vmatprep.subr.bf16.mxu0 0
        %1169 = vmatpush1.bf16.xpose.msra.mxu0 0
        %1170 = vmatprep.subr.bf16.mxu0 0
        %1171 = vmatpush1.bf16.xpose.msra.mxu0 0
        %1172 = vmatprep.subr.bf16.mxu0 0
        %1173 = vmatpush1.bf16.xpose.msra.mxu0 0
        %1174 = vmatprep.subr.bf16.mxu0 0
        %1175 = vmatpush1.bf16.xpose.msra.mxu0 0
        %1176 = vmatprep.subr.bf16.mxu0 0
        %1177 = vmatpush1.bf16.xpose.msra.mxu0 0
        %1178 = vmatprep.subr.bf16.mxu0 0
        %1179 = vmatpush1.bf16.xpose.msra.mxu0 0
        %1180 = vmatprep.mubr.bf16.mxu0 0
        %1181 = vmatmul.mubr.bf16.gmra.mrb[0].mxu0 %v1143
        %v1182 = vpop.f32.mrb[0].mxu0
        %v1183 = vadd.f32 %v743, %v1182
        %v1184 = vpop.f32.mrb[0].mxu0
        %v1185 = vpop.f32.mrb[0].mxu0
        %v1186 = vpop.f32.mrb[0].mxu0
        %1187 = vdwg.mxu0
        %v1188 = vsel %vm869, %v1133, -inf
        %1189 = vmax.xlane.f32.xlu0 %v1188
        %v1190 = vpop.xlane.xlu0 %1189
        %v1191 = vsel %vm869, %v1183, -inf
        %1192 = vmax.xlane.f32.xlu0 %v1191
        %v1193 = vpop.xlane.xlu0 %1192
        %v1194 = vsub.f32 %v1133, %v1190
        %v1195 = vsub.f32 %v1183, %v1193
        %v1196 = vmul.f32 %v1194, 1.442695
        %v1197 = vpow.pop %v1196
        %v1198 = vmul.f32 %v1195, 1.442695
        %v1199 = vpow.pop %v1198
        %v1200 = vsel %vm869, %v1197, 0.0
        %1201 = vadd.xlane.f32.xlu0 %v1200
        %v1202 = vpop.xlane.xlu0 %1201
        %v1203 = vsel %vm869, %v1199, 0.0
        %1204 = vadd.xlane.f32.xlu0 %v1203
        %v1205 = vpop.xlane.xlu0 %1204
        %v1206 = vrcp.pop %v1202
        %v1207 = vrcp.pop %v1205
        %v1208 = vmul.f32 %v1197, %v1206
        %v1209 = vmul.f32 %v1199, %v1207
        %v1210 = vpack.c.bf16 %v1208, %v1208
        %v1211 = vpack.c.bf16 %v1209, %v1209
        %1212 = vrot.lane.b32.xlu0 %v864, 56
        %v1213 = vpop.permute.xlu0 %1212
        %v1215 = vsel %vm869, %v1210, 0
        %v1218 = vsel %vm994, %v1213, 0
        %1220 = vmatprep.subr.bf16.mxu0 0
        %1221 = vmatpush1.bf16.msra.mxu0 %v1218
        %1222 = vmatprep.subr.bf16.mxu0 0
        %1223 = vmatpush1.bf16.msra.mxu0 0
        %1224 = vmatprep.subr.bf16.mxu0 0
        %1225 = vmatpush1.bf16.msra.mxu0 0
        %1226 = vmatprep.subr.bf16.mxu0 0
        %1227 = vmatpush1.bf16.msra.mxu0 0
        %1228 = vmatprep.subr.bf16.mxu0 0
        %1229 = vmatpush1.bf16.msra.mxu0 0
        %1230 = vmatprep.subr.bf16.mxu0 0
        %1231 = vmatpush1.bf16.msra.mxu0 0
        %1232 = vmatprep.subr.bf16.mxu0 0
        %1233 = vmatpush1.bf16.msra.mxu0 0
        %1234 = vmatprep.subr.bf16.mxu0 0
        %1235 = vmatpush1.bf16.msra.mxu0 0
        %1236 = vmatprep.subr.bf16.mxu0 0
        %1237 = vmatpush1.bf16.msra.mxu0 0
        %1238 = vmatprep.subr.bf16.mxu0 0
        %1239 = vmatpush1.bf16.msra.mxu0 0
        %1240 = vmatprep.subr.bf16.mxu0 0
        %1241 = vmatpush1.bf16.msra.mxu0 0
        %1242 = vmatprep.subr.bf16.mxu0 0
        %1243 = vmatpush1.bf16.msra.mxu0 0
        %1244 = vmatprep.subr.bf16.mxu0 0
        %1245 = vmatpush1.bf16.msra.mxu0 0
        %1246 = vmatprep.subr.bf16.mxu0 0
        %1247 = vmatpush1.bf16.msra.mxu0 0
        %1248 = vmatprep.subr.bf16.mxu0 0
        %1249 = vmatpush1.bf16.msra.mxu0 0
        %1250 = vmatprep.subr.bf16.mxu0 0
        %1251 = vmatpush1.bf16.msra.mxu0 0
        %1252 = vmatprep.mubr.bf16.mxu0 0
        %1253 = vmatmul.mubr.bf16.gmra.mrb[0].mxu0 %v1215
        %v1254 = vpop.f32.mrb[0].mxu0
        %v1255 = vadd.f32 0.0, %v1254
        %v1256 = vpop.f32.mrb[0].mxu0
        %v1257 = vpop.f32.mrb[0].mxu0
        %v1258 = vpop.f32.mrb[0].mxu0
        %1259 = vdwg.mxu0
        %1260 = vrot.lane.b32.xlu0 %v865, 56
        %v1261 = vpop.permute.xlu0 %1260
        %v1263 = vsel %vm869, %v1211, 0
        %v1266 = vsel %vm994, %v1261, 0
        %1268 = vmatprep.subr.bf16.mxu0 0
        %1269 = vmatpush1.bf16.msra.mxu0 %v1266
        %1270 = vmatprep.subr.bf16.mxu0 0
        %1271 = vmatpush1.bf16.msra.mxu0 0
        %1272 = vmatprep.subr.bf16.mxu0 0
        %1273 = vmatpush1.bf16.msra.mxu0 0
        %1274 = vmatprep.subr.bf16.mxu0 0
        %1275 = vmatpush1.bf16.msra.mxu0 0
        %1276 = vmatprep.subr.bf16.mxu0 0
        %1277 = vmatpush1.bf16.msra.mxu0 0
        %1278 = vmatprep.subr.bf16.mxu0 0
        %1279 = vmatpush1.bf16.msra.mxu0 0
        %1280 = vmatprep.subr.bf16.mxu0 0
        %1281 = vmatpush1.bf16.msra.mxu0 0
        %1282 = vmatprep.subr.bf16.mxu0 0
        %1283 = vmatpush1.bf16.msra.mxu0 0
        %1284 = vmatprep.subr.bf16.mxu0 0
        %1285 = vmatpush1.bf16.msra.mxu0 0
        %1286 = vmatprep.subr.bf16.mxu0 0
        %1287 = vmatpush1.bf16.msra.mxu0 0
        %1288 = vmatprep.subr.bf16.mxu0 0
        %1289 = vmatpush1.bf16.msra.mxu0 0
        %1290 = vmatprep.subr.bf16.mxu0 0
        %1291 = vmatpush1.bf16.msra.mxu0 0
        %1292 = vmatprep.subr.bf16.mxu0 0
        %1293 = vmatpush1.bf16.msra.mxu0 0
        %1294 = vmatprep.subr.bf16.mxu0 0
        %1295 = vmatpush1.bf16.msra.mxu0 0
        %1296 = vmatprep.subr.bf16.mxu0 0
        %1297 = vmatpush1.bf16.msra.mxu0 0
        %1298 = vmatprep.subr.bf16.mxu0 0
        %1299 = vmatpush1.bf16.msra.mxu0 0
        %1300 = vmatprep.mubr.bf16.mxu0 0
        %1301 = vmatmul.mubr.bf16.gmra.mrb[0].mxu0 %v1263
        %v1302 = vpop.f32.mrb[0].mxu0
        %v1303 = vadd.f32 0.0, %v1302
        %v1304 = vpop.f32.mrb[0].mxu0
        %v1305 = vpop.f32.mrb[0].mxu0
        %v1306 = vpop.f32.mrb[0].mxu0
        %1307 = vdwg.mxu0
        %1310 = vrot.lane.b32.xlu0 %v1255, 8
        %v1311 = vpop.permute.xlu0 %1310
        %1312 = vrot.lane.b32.xlu0 %v1303, 8
        %v1313 = vpop.permute.xlu0 %1312
        %vm1316 = vcmask 130112
        %1317 = vst.msk [vmem:[#allocation3] sm:$0xff] %vm1316, %v1311
        %1318 = vst.msk [vmem:[#allocation3 + $0x8] sm:$0xff] %vm1316, %v1313
        %1319 = vrot.lane.b32.xlu0 %v864, 112
        %v1320 = vpop.permute.xlu0 %1319
        %1321 = vrot.lane.b32.xlu0 %v864, 80
        %v1322 = vpop.permute.xlu0 %1321
        %v1324 = vsel %vm869, %v1320, 0
        %v1327 = vsel %vm869, %v1322, 0
        %1329 = vmatprep.subr.bf16.mxu0 0
        %1330 = vmatpush1.bf16.xpose.msra.mxu0 %v1327
        %1331 = vmatprep.subr.bf16.mxu0 0
        %1332 = vmatpush1.bf16.xpose.msra.mxu0 0
        %1333 = vmatprep.subr.bf16.mxu0 0
        %1334 = vmatpush1.bf16.xpose.msra.mxu0 0
        %1335 = vmatprep.subr.bf16.mxu0 0
        %1336 = vmatpush1.bf16.xpose.msra.mxu0 0
        %1337 = vmatprep.subr.bf16.mxu0 0
        %1338 = vmatpush1.bf16.xpose.msra.mxu0 0
        %1339 = vmatprep.subr.bf16.mxu0 0
        %1340 = vmatpush1.bf16.xpose.msra.mxu0 0
        %1341 = vmatprep.subr.bf16.mxu0 0
        %1342 = vmatpush1.bf16.xpose.msra.mxu0 0
        %1343 = vmatprep.subr.bf16.mxu0 0
        %1344 = vmatpush1.bf16.xpose.msra.mxu0 0
        %1345 = vmatprep.subr.bf16.mxu0 0
        %1346 = vmatpush1.bf16.xpose.msra.mxu0 0
        %1347 = vmatprep.subr.bf16.mxu0 0
        %1348 = vmatpush1.bf16.xpose.msra.mxu0 0
        %1349 = vmatprep.subr.bf16.mxu0 0
        %1350 = vmatpush1.bf16.xpose.msra.mxu0 0
        %1351 = vmatprep.subr.bf16.mxu0 0
        %1352 = vmatpush1.bf16.xpose.msra.mxu0 0
        %1353 = vmatprep.subr.bf16.mxu0 0
        %1354 = vmatpush1.bf16.xpose.msra.mxu0 0
        %1355 = vmatprep.subr.bf16.mxu0 0
        %1356 = vmatpush1.bf16.xpose.msra.mxu0 0
        %1357 = vmatprep.subr.bf16.mxu0 0
        %1358 = vmatpush1.bf16.xpose.msra.mxu0 0
        %1359 = vmatprep.subr.bf16.mxu0 0
        %1360 = vmatpush1.bf16.xpose.msra.mxu0 0
        %1361 = vmatprep.mubr.bf16.mxu0 0
        %1362 = vmatmul.mubr.bf16.gmra.mrb[0].mxu0 %v1324
        %v1363 = vpop.f32.mrb[0].mxu0
        %v1364 = vadd.f32 %v743, %v1363
        %v1365 = vpop.f32.mrb[0].mxu0
        %v1366 = vpop.f32.mrb[0].mxu0
        %v1367 = vpop.f32.mrb[0].mxu0
        %1368 = vdwg.mxu0
        %1369 = vrot.lane.b32.xlu0 %v865, 112
        %v1370 = vpop.permute.xlu0 %1369
        %1371 = vrot.lane.b32.xlu0 %v865, 80
        %v1372 = vpop.permute.xlu0 %1371
        %v1374 = vsel %vm869, %v1370, 0
        %v1377 = vsel %vm869, %v1372, 0
        %1379 = vmatprep.subr.bf16.mxu0 0
        %1380 = vmatpush1.bf16.xpose.msra.mxu0 %v1377
        %1381 = vmatprep.subr.bf16.mxu0 0
        %1382 = vmatpush1.bf16.xpose.msra.mxu0 0
        %1383 = vmatprep.subr.bf16.mxu0 0
        %1384 = vmatpush1.bf16.xpose.msra.mxu0 0
        %1385 = vmatprep.subr.bf16.mxu0 0
        %1386 = vmatpush1.bf16.xpose.msra.mxu0 0
        %1387 = vmatprep.subr.bf16.mxu0 0
        %1388 = vmatpush1.bf16.xpose.msra.mxu0 0
        %1389 = vmatprep.subr.bf16.mxu0 0
        %1390 = vmatpush1.bf16.xpose.msra.mxu0 0
        %1391 = vmatprep.subr.bf16.mxu0 0
        %1392 = vmatpush1.bf16.xpose.msra.mxu0 0
        %1393 = vmatprep.subr.bf16.mxu0 0
        %1394 = vmatpush1.bf16.xpose.msra.mxu0 0
        %1395 = vmatprep.subr.bf16.mxu0 0
        %1396 = vmatpush1.bf16.xpose.msra.mxu0 0
        %1397 = vmatprep.subr.bf16.mxu0 0
        %1398 = vmatpush1.bf16.xpose.msra.mxu0 0
        %1399 = vmatprep.subr.bf16.mxu0 0
        %1400 = vmatpush1.bf16.xpose.msra.mxu0 0
        %1401 = vmatprep.subr.bf16.mxu0 0
        %1402 = vmatpush1.bf16.xpose.msra.mxu0 0
        %1403 = vmatprep.subr.bf16.mxu0 0
        %1404 = vmatpush1.bf16.xpose.msra.mxu0 0
        %1405 = vmatprep.subr.bf16.mxu0 0
        %1406 = vmatpush1.bf16.xpose.msra.mxu0 0
        %1407 = vmatprep.subr.bf16.mxu0 0
        %1408 = vmatpush1.bf16.xpose.msra.mxu0 0
        %1409 = vmatprep.subr.bf16.mxu0 0
        %1410 = vmatpush1.bf16.xpose.msra.mxu0 0
        %1411 = vmatprep.mubr.bf16.mxu0 0
        %1412 = vmatmul.mubr.bf16.gmra.mrb[0].mxu0 %v1374
        %v1413 = vpop.f32.mrb[0].mxu0
        %v1414 = vadd.f32 %v743, %v1413
        %v1415 = vpop.f32.mrb[0].mxu0
        %v1416 = vpop.f32.mrb[0].mxu0
        %v1417 = vpop.f32.mrb[0].mxu0
        %1418 = vdwg.mxu0
        %v1419 = vsel %vm869, %v1364, -inf
        %1420 = vmax.xlane.f32.xlu0 %v1419
        %v1421 = vpop.xlane.xlu0 %1420
        %v1422 = vsel %vm869, %v1414, -inf
        %1423 = vmax.xlane.f32.xlu0 %v1422
        %v1424 = vpop.xlane.xlu0 %1423
        %v1425 = vsub.f32 %v1364, %v1421
        %v1426 = vsub.f32 %v1414, %v1424
        %v1427 = vmul.f32 %v1425, 1.442695
        %v1428 = vpow.pop %v1427
        %v1429 = vmul.f32 %v1426, 1.442695
        %v1430 = vpow.pop %v1429
        %v1431 = vsel %vm869, %v1428, 0.0
        %1432 = vadd.xlane.f32.xlu0 %v1431
        %v1433 = vpop.xlane.xlu0 %1432
        %v1434 = vsel %vm869, %v1430, 0.0
        %1435 = vadd.xlane.f32.xlu0 %v1434
        %v1436 = vpop.xlane.xlu0 %1435
        %v1437 = vrcp.pop %v1433
        %v1438 = vrcp.pop %v1436
        %v1439 = vmul.f32 %v1428, %v1437
        %v1440 = vmul.f32 %v1430, %v1438
        %v1441 = vpack.c.bf16 %v1439, %v1439
        %v1442 = vpack.c.bf16 %v1440, %v1440
        %1443 = vrot.lane.b32.xlu0 %v864, 48
        %v1444 = vpop.permute.xlu0 %1443
        %v1446 = vsel %vm869, %v1441, 0
        %v1449 = vsel %vm994, %v1444, 0
        %1451 = vmatprep.subr.bf16.mxu0 0
        %1452 = vmatpush1.bf16.msra.mxu0 %v1449
        %1453 = vmatprep.subr.bf16.mxu0 0
        %1454 = vmatpush1.bf16.msra.mxu0 0
        %1455 = vmatprep.subr.bf16.mxu0 0
        %1456 = vmatpush1.bf16.msra.mxu0 0
        %1457 = vmatprep.subr.bf16.mxu0 0
        %1458 = vmatpush1.bf16.msra.mxu0 0
        %1459 = vmatprep.subr.bf16.mxu0 0
        %1460 = vmatpush1.bf16.msra.mxu0 0
        %1461 = vmatprep.subr.bf16.mxu0 0
        %1462 = vmatpush1.bf16.msra.mxu0 0
        %1463 = vmatprep.subr.bf16.mxu0 0
        %1464 = vmatpush1.bf16.msra.mxu0 0
        %1465 = vmatprep.subr.bf16.mxu0 0
        %1466 = vmatpush1.bf16.msra.mxu0 0
        %1467 = vmatprep.subr.bf16.mxu0 0
        %1468 = vmatpush1.bf16.msra.mxu0 0
        %1469 = vmatprep.subr.bf16.mxu0 0
        %1470 = vmatpush1.bf16.msra.mxu0 0
        %1471 = vmatprep.subr.bf16.mxu0 0
        %1472 = vmatpush1.bf16.msra.mxu0 0
        %1473 = vmatprep.subr.bf16.mxu0 0
        %1474 = vmatpush1.bf16.msra.mxu0 0
        %1475 = vmatprep.subr.bf16.mxu0 0
        %1476 = vmatpush1.bf16.msra.mxu0 0
        %1477 = vmatprep.subr.bf16.mxu0 0
        %1478 = vmatpush1.bf16.msra.mxu0 0
        %1479 = vmatprep.subr.bf16.mxu0 0
        %1480 = vmatpush1.bf16.msra.mxu0 0
        %1481 = vmatprep.subr.bf16.mxu0 0
        %1482 = vmatpush1.bf16.msra.mxu0 0
        %1483 = vmatprep.mubr.bf16.mxu0 0
        %1484 = vmatmul.mubr.bf16.gmra.mrb[0].mxu0 %v1446
        %v1485 = vpop.f32.mrb[0].mxu0
        %v1486 = vadd.f32 0.0, %v1485
        %v1487 = vpop.f32.mrb[0].mxu0
        %v1488 = vpop.f32.mrb[0].mxu0
        %v1489 = vpop.f32.mrb[0].mxu0
        %1490 = vdwg.mxu0
        %1491 = vrot.lane.b32.xlu0 %v865, 48
        %v1492 = vpop.permute.xlu0 %1491
        %v1494 = vsel %vm869, %v1442, 0
        %v1497 = vsel %vm994, %v1492, 0
        %1499 = vmatprep.subr.bf16.mxu0 0
        %1500 = vmatpush1.bf16.msra.mxu0 %v1497
        %1501 = vmatprep.subr.bf16.mxu0 0
        %1502 = vmatpush1.bf16.msra.mxu0 0
        %1503 = vmatprep.subr.bf16.mxu0 0
        %1504 = vmatpush1.bf16.msra.mxu0 0
        %1505 = vmatprep.subr.bf16.mxu0 0
        %1506 = vmatpush1.bf16.msra.mxu0 0
        %1507 = vmatprep.subr.bf16.mxu0 0
        %1508 = vmatpush1.bf16.msra.mxu0 0
        %1509 = vmatprep.subr.bf16.mxu0 0
        %1510 = vmatpush1.bf16.msra.mxu0 0
        %1511 = vmatprep.subr.bf16.mxu0 0
        %1512 = vmatpush1.bf16.msra.mxu0 0
        %1513 = vmatprep.subr.bf16.mxu0 0
        %1514 = vmatpush1.bf16.msra.mxu0 0
        %1515 = vmatprep.subr.bf16.mxu0 0
        %1516 = vmatpush1.bf16.msra.mxu0 0
        %1517 = vmatprep.subr.bf16.mxu0 0
        %1518 = vmatpush1.bf16.msra.mxu0 0
        %1519 = vmatprep.subr.bf16.mxu0 0
        %1520 = vmatpush1.bf16.msra.mxu0 0
        %1521 = vmatprep.subr.bf16.mxu0 0
        %1522 = vmatpush1.bf16.msra.mxu0 0
        %1523 = vmatprep.subr.bf16.mxu0 0
        %1524 = vmatpush1.bf16.msra.mxu0 0
        %1525 = vmatprep.subr.bf16.mxu0 0
        %1526 = vmatpush1.bf16.msra.mxu0 0
        %1527 = vmatprep.subr.bf16.mxu0 0
        %1528 = vmatpush1.bf16.msra.mxu0 0
        %1529 = vmatprep.subr.bf16.mxu0 0
        %1530 = vmatpush1.bf16.msra.mxu0 0
        %1531 = vmatprep.mubr.bf16.mxu0 0
        %1532 = vmatmul.mubr.bf16.gmra.mrb[0].mxu0 %v1494
        %v1533 = vpop.f32.mrb[0].mxu0
        %v1534 = vadd.f32 0.0, %v1533
        %v1535 = vpop.f32.mrb[0].mxu0
        %v1536 = vpop.f32.mrb[0].mxu0
        %v1537 = vpop.f32.mrb[0].mxu0
        %1538 = vdwg.mxu0
        %1541 = vrot.lane.b32.xlu0 %v1486, 16
        %v1542 = vpop.permute.xlu0 %1541
        %1543 = vrot.lane.b32.xlu0 %v1534, 16
        %v1544 = vpop.permute.xlu0 %1543
        %vm1547 = vcmask 195712
        %1548 = vst.msk [vmem:[#allocation3] sm:$0xff] %vm1547, %v1542
        %1549 = vst.msk [vmem:[#allocation3 + $0x8] sm:$0xff] %vm1547, %v1544
        %1550 = vrot.lane.b32.xlu0 %v864, 104
        %v1551 = vpop.permute.xlu0 %1550
        %1552 = vrot.lane.b32.xlu0 %v864, 72
        %v1553 = vpop.permute.xlu0 %1552
        %v1555 = vsel %vm869, %v1551, 0
        %v1558 = vsel %vm869, %v1553, 0
        %1560 = vmatprep.subr.bf16.mxu0 0
        %1561 = vmatpush1.bf16.xpose.msra.mxu0 %v1558
        %1562 = vmatprep.subr.bf16.mxu0 0
        %1563 = vmatpush1.bf16.xpose.msra.mxu0 0
        %1564 = vmatprep.subr.bf16.mxu0 0
        %1565 = vmatpush1.bf16.xpose.msra.mxu0 0
        %1566 = vmatprep.subr.bf16.mxu0 0
        %1567 = vmatpush1.bf16.xpose.msra.mxu0 0
        %1568 = vmatprep.subr.bf16.mxu0 0
        %1569 = vmatpush1.bf16.xpose.msra.mxu0 0
        %1570 = vmatprep.subr.bf16.mxu0 0
        %1571 = vmatpush1.bf16.xpose.msra.mxu0 0
        %1572 = vmatprep.subr.bf16.mxu0 0
        %1573 = vmatpush1.bf16.xpose.msra.mxu0 0
        %1574 = vmatprep.subr.bf16.mxu0 0
        %1575 = vmatpush1.bf16.xpose.msra.mxu0 0
        %1576 = vmatprep.subr.bf16.mxu0 0
        %1577 = vmatpush1.bf16.xpose.msra.mxu0 0
        %1578 = vmatprep.subr.bf16.mxu0 0
        %1579 = vmatpush1.bf16.xpose.msra.mxu0 0
        %1580 = vmatprep.subr.bf16.mxu0 0
        %1581 = vmatpush1.bf16.xpose.msra.mxu0 0
        %1582 = vmatprep.subr.bf16.mxu0 0
        %1583 = vmatpush1.bf16.xpose.msra.mxu0 0
        %1584 = vmatprep.subr.bf16.mxu0 0
        %1585 = vmatpush1.bf16.xpose.msra.mxu0 0
        %1586 = vmatprep.subr.bf16.mxu0 0
        %1587 = vmatpush1.bf16.xpose.msra.mxu0 0
        %1588 = vmatprep.subr.bf16.mxu0 0
        %1589 = vmatpush1.bf16.xpose.msra.mxu0 0
        %1590 = vmatprep.subr.bf16.mxu0 0
        %1591 = vmatpush1.bf16.xpose.msra.mxu0 0
        %1592 = vmatprep.mubr.bf16.mxu0 0
        %1593 = vmatmul.mubr.bf16.gmra.mrb[0].mxu0 %v1555
        %v1594 = vpop.f32.mrb[0].mxu0
        %v1595 = vadd.f32 %v743, %v1594
        %v1596 = vpop.f32.mrb[0].mxu0
        %v1597 = vpop.f32.mrb[0].mxu0
        %v1598 = vpop.f32.mrb[0].mxu0
        %1599 = vdwg.mxu0
        %1600 = vrot.lane.b32.xlu0 %v865, 104
        %v1601 = vpop.permute.xlu0 %1600
        %1602 = vrot.lane.b32.xlu0 %v865, 72
        %v1603 = vpop.permute.xlu0 %1602
        %v1605 = vsel %vm869, %v1601, 0
        %v1608 = vsel %vm869, %v1603, 0
        %1610 = vmatprep.subr.bf16.mxu0 0
        %1611 = vmatpush1.bf16.xpose.msra.mxu0 %v1608
        %1612 = vmatprep.subr.bf16.mxu0 0
        %1613 = vmatpush1.bf16.xpose.msra.mxu0 0
        %1614 = vmatprep.subr.bf16.mxu0 0
        %1615 = vmatpush1.bf16.xpose.msra.mxu0 0
        %1616 = vmatprep.subr.bf16.mxu0 0
        %1617 = vmatpush1.bf16.xpose.msra.mxu0 0
        %1618 = vmatprep.subr.bf16.mxu0 0
        %1619 = vmatpush1.bf16.xpose.msra.mxu0 0
        %1620 = vmatprep.subr.bf16.mxu0 0
        %1621 = vmatpush1.bf16.xpose.msra.mxu0 0
        %1622 = vmatprep.subr.bf16.mxu0 0
        %1623 = vmatpush1.bf16.xpose.msra.mxu0 0
        %1624 = vmatprep.subr.bf16.mxu0 0
        %1625 = vmatpush1.bf16.xpose.msra.mxu0 0
        %1626 = vmatprep.subr.bf16.mxu0 0
        %1627 = vmatpush1.bf16.xpose.msra.mxu0 0
        %1628 = vmatprep.subr.bf16.mxu0 0
        %1629 = vmatpush1.bf16.xpose.msra.mxu0 0
        %1630 = vmatprep.subr.bf16.mxu0 0
        %1631 = vmatpush1.bf16.xpose.msra.mxu0 0
        %1632 = vmatprep.subr.bf16.mxu0 0
        %1633 = vmatpush1.bf16.xpose.msra.mxu0 0
        %1634 = vmatprep.subr.bf16.mxu0 0
        %1635 = vmatpush1.bf16.xpose.msra.mxu0 0
        %1636 = vmatprep.subr.bf16.mxu0 0
        %1637 = vmatpush1.bf16.xpose.msra.mxu0 0
        %1638 = vmatprep.subr.bf16.mxu0 0
        %1639 = vmatpush1.bf16.xpose.msra.mxu0 0
        %1640 = vmatprep.subr.bf16.mxu0 0
        %1641 = vmatpush1.bf16.xpose.msra.mxu0 0
        %1642 = vmatprep.mubr.bf16.mxu0 0
        %1643 = vmatmul.mubr.bf16.gmra.mrb[0].mxu0 %v1605
        %v1644 = vpop.f32.mrb[0].mxu0
        %v1645 = vadd.f32 %v743, %v1644
        %v1646 = vpop.f32.mrb[0].mxu0
        %v1647 = vpop.f32.mrb[0].mxu0
        %v1648 = vpop.f32.mrb[0].mxu0
        %1649 = vdwg.mxu0
        %v1650 = vsel %vm869, %v1595, -inf
        %1651 = vmax.xlane.f32.xlu0 %v1650
        %v1652 = vpop.xlane.xlu0 %1651
        %v1653 = vsel %vm869, %v1645, -inf
        %1654 = vmax.xlane.f32.xlu0 %v1653
        %v1655 = vpop.xlane.xlu0 %1654
        %v1656 = vsub.f32 %v1595, %v1652
        %v1657 = vsub.f32 %v1645, %v1655
        %v1658 = vmul.f32 %v1656, 1.442695
        %v1659 = vpow.pop %v1658
        %v1660 = vmul.f32 %v1657, 1.442695
        %v1661 = vpow.pop %v1660
        %v1662 = vsel %vm869, %v1659, 0.0
        %1663 = vadd.xlane.f32.xlu0 %v1662
        %v1664 = vpop.xlane.xlu0 %1663
        %v1665 = vsel %vm869, %v1661, 0.0
        %1666 = vadd.xlane.f32.xlu0 %v1665
        %v1667 = vpop.xlane.xlu0 %1666
        %v1668 = vrcp.pop %v1664
        %v1669 = vrcp.pop %v1667
        %v1670 = vmul.f32 %v1659, %v1668
        %v1671 = vmul.f32 %v1661, %v1669
        %v1672 = vpack.c.bf16 %v1670, %v1670
        %v1673 = vpack.c.bf16 %v1671, %v1671
        %1674 = vrot.lane.b32.xlu0 %v864, 40
        %v1675 = vpop.permute.xlu0 %1674
        %v1677 = vsel %vm869, %v1672, 0
        %v1680 = vsel %vm994, %v1675, 0
        %1682 = vmatprep.subr.bf16.mxu0 0
        %1683 = vmatpush1.bf16.msra.mxu0 %v1680
        %1684 = vmatprep.subr.bf16.mxu0 0
        %1685 = vmatpush1.bf16.msra.mxu0 0
        %1686 = vmatprep.subr.bf16.mxu0 0
        %1687 = vmatpush1.bf16.msra.mxu0 0
        %1688 = vmatprep.subr.bf16.mxu0 0
        %1689 = vmatpush1.bf16.msra.mxu0 0
        %1690 = vmatprep.subr.bf16.mxu0 0
        %1691 = vmatpush1.bf16.msra.mxu0 0
        %1692 = vmatprep.subr.bf16.mxu0 0
        %1693 = vmatpush1.bf16.msra.mxu0 0
        %1694 = vmatprep.subr.bf16.mxu0 0
        %1695 = vmatpush1.bf16.msra.mxu0 0
        %1696 = vmatprep.subr.bf16.mxu0 0
        %1697 = vmatpush1.bf16.msra.mxu0 0
        %1698 = vmatprep.subr.bf16.mxu0 0
        %1699 = vmatpush1.bf16.msra.mxu0 0
        %1700 = vmatprep.subr.bf16.mxu0 0
        %1701 = vmatpush1.bf16.msra.mxu0 0
        %1702 = vmatprep.subr.bf16.mxu0 0
        %1703 = vmatpush1.bf16.msra.mxu0 0
        %1704 = vmatprep.subr.bf16.mxu0 0
        %1705 = vmatpush1.bf16.msra.mxu0 0
        %1706 = vmatprep.subr.bf16.mxu0 0
        %1707 = vmatpush1.bf16.msra.mxu0 0
        %1708 = vmatprep.subr.bf16.mxu0 0
        %1709 = vmatpush1.bf16.msra.mxu0 0
        %1710 = vmatprep.subr.bf16.mxu0 0
        %1711 = vmatpush1.bf16.msra.mxu0 0
        %1712 = vmatprep.subr.bf16.mxu0 0
        %1713 = vmatpush1.bf16.msra.mxu0 0
        %1714 = vmatprep.mubr.bf16.mxu0 0
        %1715 = vmatmul.mubr.bf16.gmra.mrb[0].mxu0 %v1677
        %v1716 = vpop.f32.mrb[0].mxu0
        %v1717 = vadd.f32 0.0, %v1716
        %v1718 = vpop.f32.mrb[0].mxu0
        %v1719 = vpop.f32.mrb[0].mxu0
        %v1720 = vpop.f32.mrb[0].mxu0
        %1721 = vdwg.mxu0
        %1722 = vrot.lane.b32.xlu0 %v865, 40
        %v1723 = vpop.permute.xlu0 %1722
        %v1725 = vsel %vm869, %v1673, 0
        %v1728 = vsel %vm994, %v1723, 0
        %1730 = vmatprep.subr.bf16.mxu0 0
        %1731 = vmatpush1.bf16.msra.mxu0 %v1728
        %1732 = vmatprep.subr.bf16.mxu0 0
        %1733 = vmatpush1.bf16.msra.mxu0 0
        %1734 = vmatprep.subr.bf16.mxu0 0
        %1735 = vmatpush1.bf16.msra.mxu0 0
        %1736 = vmatprep.subr.bf16.mxu0 0
        %1737 = vmatpush1.bf16.msra.mxu0 0
        %1738 = vmatprep.subr.bf16.mxu0 0
        %1739 = vmatpush1.bf16.msra.mxu0 0
        %1740 = vmatprep.subr.bf16.mxu0 0
        %1741 = vmatpush1.bf16.msra.mxu0 0
        %1742 = vmatprep.subr.bf16.mxu0 0
        %1743 = vmatpush1.bf16.msra.mxu0 0
        %1744 = vmatprep.subr.bf16.mxu0 0
        %1745 = vmatpush1.bf16.msra.mxu0 0
        %1746 = vmatprep.subr.bf16.mxu0 0
        %1747 = vmatpush1.bf16.msra.mxu0 0
        %1748 = vmatprep.subr.bf16.mxu0 0
        %1749 = vmatpush1.bf16.msra.mxu0 0
        %1750 = vmatprep.subr.bf16.mxu0 0
        %1751 = vmatpush1.bf16.msra.mxu0 0
        %1752 = vmatprep.subr.bf16.mxu0 0
        %1753 = vmatpush1.bf16.msra.mxu0 0
        %1754 = vmatprep.subr.bf16.mxu0 0
        %1755 = vmatpush1.bf16.msra.mxu0 0
        %1756 = vmatprep.subr.bf16.mxu0 0
        %1757 = vmatpush1.bf16.msra.mxu0 0
        %1758 = vmatprep.subr.bf16.mxu0 0
        %1759 = vmatpush1.bf16.msra.mxu0 0
        %1760 = vmatprep.subr.bf16.mxu0 0
        %1761 = vmatpush1.bf16.msra.mxu0 0
        %1762 = vmatprep.mubr.bf16.mxu0 0
        %1763 = vmatmul.mubr.bf16.gmra.mrb[0].mxu0 %v1725
        %v1764 = vpop.f32.mrb[0].mxu0
        %v1765 = vadd.f32 0.0, %v1764
        %v1766 = vpop.f32.mrb[0].mxu0
        %v1767 = vpop.f32.mrb[0].mxu0
        %v1768 = vpop.f32.mrb[0].mxu0
        %1769 = vdwg.mxu0
        %1772 = vrot.lane.b32.xlu0 %v1717, 24
        %v1773 = vpop.permute.xlu0 %1772
        %1774 = vrot.lane.b32.xlu0 %v1765, 24
        %v1775 = vpop.permute.xlu0 %1774
        %vm1778 = vcmask 261312
        %1779 = vst.msk [vmem:[#allocation3] sm:$0xff] %vm1778, %v1773
        %1780 = vst.msk [vmem:[#allocation3 + $0x8] sm:$0xff] %vm1778, %v1775
        %v1781 = vld [vmem:[#allocation3] sm:$0xff]
        %v1782 = vld [vmem:[#allocation3 + $0x8] sm:$0xff]
        %v1783 = vpack.c.bf16 %v1781, %v1781
        %v1784 = vpack.c.bf16 %v1782, %v1782
        %v1785 = vld [vmem:[%s693] sm:$0xf]
        %v1786 = vld [vmem:[%s693 + $0x4] sm:$0xf]
        %v1787 = vld [vmem:[%s693 + $0x8] sm:$0xf]
        %v1788 = vld [vmem:[%s693 + $0xc] sm:$0xf]
        %v1791 = vunpack.c.l.b16 %v1783
        %v1792 = vunpack.c.l.b16 %v1784
        %v1793 = vpack.c.b16 %v1792, %v1791
        %v1798 = vunpack.c.l.b16 %v1785
        %v1799 = vunpack.c.l.b16 %v1786
        %v1800 = vunpack.c.l.b16 %v1787
        %v1801 = vunpack.c.l.b16 %v1788
        %v1802 = vpack.c.b16 %v1799, %v1798
        %v1803 = vpack.c.b16 %v1801, %v1800
        %v1807 = vsel %vm746, %v1793, 0
        %1809 = vmatprep.subr.bf16.mxu0 0
        %1810 = vmatpush1.bf16.msra.mxu0 %v1802
        %1811 = vmatprep.subr.bf16.mxu0 0
        %1812 = vmatpush1.bf16.msra.mxu0 %v1803
        %1813 = vmatprep.subr.bf16.mxu0 0
        %1814 = vmatpush1.bf16.msra.mxu0 0
        %1815 = vmatprep.subr.bf16.mxu0 0
        %1816 = vmatpush1.bf16.msra.mxu0 0
        %1817 = vmatprep.subr.bf16.mxu0 0
        %1818 = vmatpush1.bf16.msra.mxu0 0
        %1819 = vmatprep.subr.bf16.mxu0 0
        %1820 = vmatpush1.bf16.msra.mxu0 0
        %1821 = vmatprep.subr.bf16.mxu0 0
        %1822 = vmatpush1.bf16.msra.mxu0 0
        %1823 = vmatprep.subr.bf16.mxu0 0
        %1824 = vmatpush1.bf16.msra.mxu0 0
        %1825 = vmatprep.subr.bf16.mxu0 0
        %1826 = vmatpush1.bf16.msra.mxu0 0
        %1827 = vmatprep.subr.bf16.mxu0 0
        %1828 = vmatpush1.bf16.msra.mxu0 0
        %1829 = vmatprep.subr.bf16.mxu0 0
        %1830 = vmatpush1.bf16.msra.mxu0 0
        %1831 = vmatprep.subr.bf16.mxu0 0
        %1832 = vmatpush1.bf16.msra.mxu0 0
        %1833 = vmatprep.subr.bf16.mxu0 0
        %1834 = vmatpush1.bf16.msra.mxu0 0
        %1835 = vmatprep.subr.bf16.mxu0 0
        %1836 = vmatpush1.bf16.msra.mxu0 0
        %1837 = vmatprep.subr.bf16.mxu0 0
        %1838 = vmatpush1.bf16.msra.mxu0 0
        %1839 = vmatprep.subr.bf16.mxu0 0
        %1840 = vmatpush1.bf16.msra.mxu0 0
        %1841 = vmatprep.mubr.bf16.mxu0 0
        %1842 = vmatmul.mubr.bf16.gmra.mrb[0].mxu0 %v1807
        %v1843 = vpop.f32.mrb[0].mxu0
        %v1844 = vadd.f32 0.0, %v1843
        %v1845 = vpop.f32.mrb[0].mxu0
        %v1846 = vpop.f32.mrb[0].mxu0
        %v1847 = vadd.f32 0.0, %v1846
        %v1848 = vpop.f32.mrb[0].mxu0
        %1849 = vdwg.mxu0
        %v1850 = vadd.f32 %v741, %v1844
        %v1851 = vadd.f32 %v742, %v1847
        %v1852 = vld [vmem:[%s696] sm:$0x1]
        %v1854 = vlaneseq
        %v1855 = vshrl.u32 %v1854, 7
        %v1856 = vsub.s32 0, %v1855
        %v1857 = vrot.slane %v1852, %v1856
        %v1859 = vadd.f32 %v1850, %v1857
        %v1860 = vadd.f32 %v1851, %v1857
        %v1861 = vld [vmem:[%s699] sm:$0x1]
        %v1862 = vld [vmem:[%s702] sm:$0x1]
        %v1863 = vsel %vm746, %v1859, 0.0
        %1864 = vadd.xlane.f32.xlu0 %v1863
        %v1865 = vpop.xlane.xlu0 %1864
        %v1866 = vsel %vm746, %v1860, 0.0
        %1867 = vadd.xlane.f32.xlu0 %v1866
        %v1868 = vpop.xlane.xlu0 %1867
        %v1869 = vmul.f32 %v1865, %v753
        %v1870 = vmul.f32 %v1868, %v753
        %v1871 = vsub.f32 %v1859, %v1869
        %v1872 = vsub.f32 %v1860, %v1870
        %v1873 = vmul.f32 %v1871, %v1871
        %v1874 = vmul.f32 %v1872, %v1872
        %v1875 = vsel %vm746, %v1873, 0.0
        %1876 = vadd.xlane.f32.xlu0 %v1875
        %v1877 = vpop.xlane.xlu0 %1876
        %v1878 = vsel %vm746, %v1874, 0.0
        %1879 = vadd.xlane.f32.xlu0 %v1878
        %v1880 = vpop.xlane.xlu0 %1879
        %v1881 = vmul.f32 %v1877, %v753
        %v1882 = vmul.f32 %v1880, %v753
        %v1883 = vadd.f32 %v1881, 1e-05
        %v1884 = vadd.f32 %v1882, 1e-05
        %v1885 = vrsqrt.pop %v1883
        %v1886 = vrsqrt.pop %v1884
        %v1887 = vmul.f32 %v1871, %v1885
        %v1888 = vmul.f32 %v1872, %v1886
        %v1890 = vlaneseq
        %v1891 = vshrl.u32 %v1890, 7
        %v1892 = vsub.s32 0, %v1891
        %v1893 = vrot.slane %v1861, %v1892
        %v1895 = vmul.f32 %v1887, %v1893
        %v1896 = vmul.f32 %v1888, %v1893
        %v1898 = vlaneseq
        %v1899 = vshrl.u32 %v1898, 7
        %v1900 = vsub.s32 0, %v1899
        %v1901 = vrot.slane %v1862, %v1900
        %v1903 = vadd.f32 %v1895, %v1901
        %v1904 = vadd.f32 %v1896, %v1901
        %v1905 = vpack.c.bf16 %v1903, %v1903
        %v1906 = vpack.c.bf16 %v1904, %v1904
        %v1907 = vld [vmem:[%s707] sm:$0xf]
        %v1908 = vld [vmem:[%s707 + $0x4] sm:$0xf]
        %v1909 = vld [vmem:[%s707 + $0x8] sm:$0xf]
        %v1910 = vld [vmem:[%s707 + $0xc] sm:$0xf]
        %v1911 = vld [vmem:[%s710] sm:$0x1]
        %v1913 = vlaneseq
        %v1914 = vshrl.u32 %v1913, 7
        %v1915 = vsub.s32 0, %v1914
        %v1916 = vrot.slane %v1911, %v1915
        %v1920 = vunpack.c.l.b16 %v1905
        %v1921 = vunpack.c.l.b16 %v1906
        %v1922 = vpack.c.b16 %v1921, %v1920
        %v1927 = vunpack.c.l.b16 %v1907
        %v1928 = vunpack.c.l.b16 %v1908
        %v1929 = vunpack.c.l.b16 %v1909
        %v1930 = vunpack.c.l.b16 %v1910
        %v1931 = vpack.c.b16 %v1928, %v1927
        %v1932 = vpack.c.b16 %v1930, %v1929
        %v1936 = vsel %vm746, %v1922, 0
        %1938 = vmatprep.subr.bf16.mxu0 0
        %1939 = vmatpush1.bf16.msra.mxu0 %v1931
        %1940 = vmatprep.subr.bf16.mxu0 0
        %1941 = vmatpush1.bf16.msra.mxu0 %v1932
        %1942 = vmatprep.subr.bf16.mxu0 0
        %1943 = vmatpush1.bf16.msra.mxu0 0
        %1944 = vmatprep.subr.bf16.mxu0 0
        %1945 = vmatpush1.bf16.msra.mxu0 0
        %1946 = vmatprep.subr.bf16.mxu0 0
        %1947 = vmatpush1.bf16.msra.mxu0 0
        %1948 = vmatprep.subr.bf16.mxu0 0
        %1949 = vmatpush1.bf16.msra.mxu0 0
        %1950 = vmatprep.subr.bf16.mxu0 0
        %1951 = vmatpush1.bf16.msra.mxu0 0
        %1952 = vmatprep.subr.bf16.mxu0 0
        %1953 = vmatpush1.bf16.msra.mxu0 0
        %1954 = vmatprep.subr.bf16.mxu0 0
        %1955 = vmatpush1.bf16.msra.mxu0 0
        %1956 = vmatprep.subr.bf16.mxu0 0
        %1957 = vmatpush1.bf16.msra.mxu0 0
        %1958 = vmatprep.subr.bf16.mxu0 0
        %1959 = vmatpush1.bf16.msra.mxu0 0
        %1960 = vmatprep.subr.bf16.mxu0 0
        %1961 = vmatpush1.bf16.msra.mxu0 0
        %1962 = vmatprep.subr.bf16.mxu0 0
        %1963 = vmatpush1.bf16.msra.mxu0 0
        %1964 = vmatprep.subr.bf16.mxu0 0
        %1965 = vmatpush1.bf16.msra.mxu0 0
        %1966 = vmatprep.subr.bf16.mxu0 0
        %1967 = vmatpush1.bf16.msra.mxu0 0
        %1968 = vmatprep.subr.bf16.mxu0 0
        %1969 = vmatpush1.bf16.msra.mxu0 0
        %1970 = vmatprep.mubr.bf16.mxu0 0
        %1971 = vmatmul.mubr.bf16.gmra.mrb[0].mxu0 %v1936
        %v1972 = vpop.f32.mrb[0].mxu0
        %v1973 = vadd.f32 %v1916, %v1972
        %v1974 = vpop.f32.mrb[0].mxu0
        %v1975 = vpop.f32.mrb[0].mxu0
        %v1976 = vadd.f32 %v1916, %v1975
        %v1977 = vpop.f32.mrb[0].mxu0
        %1978 = vdwg.mxu0
        %v1979 = vmul.f32 %v1973, 1.702
        %v1980 = vmul.f32 %v1976, 1.702
        %v1981 = vxor.u32 %v1979, 2147483648
        %v1982 = vxor.u32 %v1980, 2147483648
        %v1983 = vmul.f32 %v1981, 1.442695
        %v1984 = vpow.pop %v1983
        %v1985 = vmul.f32 %v1982, 1.442695
        %v1986 = vpow.pop %v1985
        %v1987 = vadd.f32 %v1984, 1.0
        %v1988 = vadd.f32 %v1986, 1.0
        %v1989 = vrcp.pop %v1987
        %v1990 = vmul.f32 1.0, %v1989
        %v1991 = vrcp.pop %v1988
        %v1992 = vmul.f32 1.0, %v1991
        %v1993 = vmul.f32 %v1973, %v1990
        %v1994 = vmul.f32 %v1976, %v1992
        %v1995 = vpack.c.bf16 %v1993, %v1993
        %v1996 = vpack.c.bf16 %v1994, %v1994
        %v1997 = vld [vmem:[%s715] sm:$0xf]
        %v1998 = vld [vmem:[%s715 + $0x4] sm:$0xf]
        %v1999 = vld [vmem:[%s715 + $0x8] sm:$0xf]
        %v2000 = vld [vmem:[%s715 + $0xc] sm:$0xf]
        %v2001 = vld [vmem:[%s715 + $0x10] sm:$0xf]
        %v2002 = vld [vmem:[%s715 + $0x14] sm:$0xf]
        %v2003 = vld [vmem:[%s715 + $0x18] sm:$0xf]
        %v2004 = vld [vmem:[%s715 + $0x1c] sm:$0xf]
        %v2005 = vld [vmem:[%s715 + $0x20] sm:$0xf]
        %v2006 = vld [vmem:[%s715 + $0x24] sm:$0xf]
        %v2007 = vld [vmem:[%s715 + $0x28] sm:$0xf]
        %v2008 = vld [vmem:[%s715 + $0x2c] sm:$0xf]
        %v2009 = vld [vmem:[%s715 + $0x30] sm:$0xf]
        %v2010 = vld [vmem:[%s715 + $0x34] sm:$0xf]
        %v2011 = vld [vmem:[%s715 + $0x38] sm:$0xf]
        %v2012 = vld [vmem:[%s715 + $0x3c] sm:$0xf]
        %v2013 = vld [vmem:[%s718] sm:$0x1]
        %v2015 = vlaneseq
        %v2016 = vshrl.u32 %v2015, 7
        %v2017 = vsub.s32 0, %v2016
        %v2018 = vrot.slane %v2013, %v2017
        %v2022 = vunpack.c.l.b16 %v1995
        %v2023 = vunpack.c.l.b16 %v1996
        %v2024 = vpack.c.b16 %v2023, %v2022
        %v2042 = vunpack.c.l.b16 %v1997
        %v2043 = vunpack.c.l.b16 %v1998
        %v2044 = vunpack.c.l.b16 %v1999
        %v2045 = vunpack.c.l.b16 %v2000
        %v2046 = vunpack.c.l.b16 %v2001
        %v2047 = vunpack.c.l.b16 %v2002
        %v2048 = vunpack.c.l.b16 %v2003
        %v2049 = vunpack.c.l.b16 %v2004
        %v2050 = vunpack.c.l.b16 %v2005
        %v2051 = vunpack.c.l.b16 %v2006
        %v2052 = vunpack.c.l.b16 %v2007
        %v2053 = vunpack.c.l.b16 %v2008
        %v2054 = vunpack.c.l.b16 %v2009
        %v2055 = vunpack.c.l.b16 %v2010
        %v2056 = vunpack.c.l.b16 %v2011
        %v2057 = vunpack.c.l.b16 %v2012
        %v2058 = vpack.c.b16 %v2043, %v2042
        %v2059 = vpack.c.b16 %v2045, %v2044
        %v2060 = vpack.c.b16 %v2047, %v2046
        %v2061 = vpack.c.b16 %v2049, %v2048
        %v2062 = vpack.c.b16 %v2051, %v2050
        %v2063 = vpack.c.b16 %v2053, %v2052
        %v2064 = vpack.c.b16 %v2055, %v2054
        %v2065 = vpack.c.b16 %v2057, %v2056
        %2074 = vmatprep.subr.bf16.mxu0 0
        %2075 = vmatpush1.bf16.msra.mxu0 %v2058
        %2076 = vmatprep.subr.bf16.mxu0 0
        %2077 = vmatpush1.bf16.msra.mxu0 %v2059
        %2078 = vmatprep.subr.bf16.mxu0 0
        %2079 = vmatpush1.bf16.msra.mxu0 %v2060
        %2080 = vmatprep.subr.bf16.mxu0 0
        %2081 = vmatpush1.bf16.msra.mxu0 %v2061
        %2082 = vmatprep.subr.bf16.mxu0 0
        %2083 = vmatpush1.bf16.msra.mxu0 %v2062
        %2084 = vmatprep.subr.bf16.mxu0 0
        %2085 = vmatpush1.bf16.msra.mxu0 %v2063
        %2086 = vmatprep.subr.bf16.mxu0 0
        %2087 = vmatpush1.bf16.msra.mxu0 %v2064
        %2088 = vmatprep.subr.bf16.mxu0 0
        %2089 = vmatpush1.bf16.msra.mxu0 %v2065
        %2090 = vmatprep.subr.bf16.mxu0 0
        %2091 = vmatpush1.bf16.msra.mxu0 0
        %2092 = vmatprep.subr.bf16.mxu0 0
        %2093 = vmatpush1.bf16.msra.mxu0 0
        %2094 = vmatprep.subr.bf16.mxu0 0
        %2095 = vmatpush1.bf16.msra.mxu0 0
        %2096 = vmatprep.subr.bf16.mxu0 0
        %2097 = vmatpush1.bf16.msra.mxu0 0
        %2098 = vmatprep.subr.bf16.mxu0 0
        %2099 = vmatpush1.bf16.msra.mxu0 0
        %2100 = vmatprep.subr.bf16.mxu0 0
        %2101 = vmatpush1.bf16.msra.mxu0 0
        %2102 = vmatprep.subr.bf16.mxu0 0
        %2103 = vmatpush1.bf16.msra.mxu0 0
        %2104 = vmatprep.subr.bf16.mxu0 0
        %2105 = vmatpush1.bf16.msra.mxu0 0
        %2106 = vmatprep.mubr.bf16.mxu0 0
        %2107 = vmatmul.mubr.bf16.gmra.mrb[0].mxu0 %v2024
        %v2108 = vpop.f32.mrb[0].mxu0
        %v2109 = vadd.f32 %v2018, %v2108
        %v2110 = vpop.f32.mrb[0].mxu0
        %v2111 = vpop.f32.mrb[0].mxu0
        %v2112 = vadd.f32 %v2018, %v2111
        %v2113 = vpop.f32.mrb[0].mxu0
        %2114 = vdwg.mxu0
        %v2115 = vadd.f32 %v1859, %v2109
        %v2116 = vadd.f32 %v1860, %v2112
        %2117 = vst.msk [vmem:[#allocation2] sm:$0xff] %vm746, %v2115
        %2118 = vst.msk [vmem:[#allocation2 + $0x8] sm:$0xff] %vm746, %v2116
        %p2119 = scmp.eq.s32.totalorder %s33, 1
        // Predicated region
        $region89: #{tpu_custom_call.1} parent=83 // pred_check
          %p2120 = pneg %p2119
        $region90: #{tpu_custom_call.1} parent=83 // pred_check_branch
          %2122 = sbr.rel (%p2120) target = $region92
        $region91: #{tpu_custom_call.1} parent=83 // pred_region
          %v2123 = vld [vmem:[%s2] sm:$0x1]
          %v2124 = vld [vmem:[%s3] sm:$0x1]
          %v2125 = vsel %vm746, %v2115, 0.0
          %2126 = vadd.xlane.f32.xlu0 %v2125
          %v2127 = vpop.xlane.xlu0 %2126
          %v2128 = vsel %vm746, %v2116, 0.0
          %2129 = vadd.xlane.f32.xlu0 %v2128
          %v2130 = vpop.xlane.xlu0 %2129
          %v2131 = vmul.f32 %v2127, %v753
          %v2132 = vmul.f32 %v2130, %v753
          %v2133 = vsub.f32 %v2115, %v2131
          %v2134 = vsub.f32 %v2116, %v2132
          %v2135 = vmul.f32 %v2133, %v2133
          %v2136 = vmul.f32 %v2134, %v2134
          %v2137 = vsel %vm746, %v2135, 0.0
          %2138 = vadd.xlane.f32.xlu0 %v2137
          %v2139 = vpop.xlane.xlu0 %2138
          %v2140 = vsel %vm746, %v2136, 0.0
          %2141 = vadd.xlane.f32.xlu0 %v2140
          %v2142 = vpop.xlane.xlu0 %2141
          %v2143 = vmul.f32 %v2139, %v753
          %v2144 = vmul.f32 %v2142, %v753
          %v2145 = vadd.f32 %v2143, 1e-05
          %v2146 = vadd.f32 %v2144, 1e-05
          %v2147 = vrsqrt.pop %v2145
          %v2148 = vrsqrt.pop %v2146
          %v2149 = vmul.f32 %v2133, %v2147
          %v2150 = vmul.f32 %v2134, %v2148
          %v2152 = vlaneseq
          %v2153 = vshrl.u32 %v2152, 7
          %v2154 = vsub.s32 0, %v2153
          %v2155 = vrot.slane %v2123, %v2154
          %v2157 = vmul.f32 %v2149, %v2155
          %v2158 = vmul.f32 %v2150, %v2155
          %v2160 = vlaneseq
          %v2161 = vshrl.u32 %v2160, 7
          %v2162 = vsub.s32 0, %v2161
          %v2163 = vrot.slane %v2124, %v2162
          %v2165 = vadd.f32 %v2157, %v2163
          %v2166 = vadd.f32 %v2158, %v2163
          %2167 = vst.msk [vmem:[#allocation5] sm:$0xff] %vm746, %v2165
          %2168 = vst.msk [vmem:[#allocation5 + $0x8] sm:$0xff] %vm746, %v2166
        $region92: #{tpu_custom_call.1} parent=83 // pred_fallthru
          _
        // Predicated region
        $region93: #{tpu_custom_call.1} parent=83 // pred_check
          %p2169 = pneg %p459
        $region94: #{tpu_custom_call.1} parent=83 // pred_check_branch
          %2171 = sbr.rel (%p2169) target = $region96
        $region95: #{tpu_custom_call.1} parent=83 // pred_region
          %s2172 = smul.u32 2, %s32
          %s2174 = ssub.s32 256, 256
          %2175 = vsyncadd [#allocation6], %s2174
          %s2176 = smul.addr %s2172, 128
          %s2177 = scalar_lea.hbm %s16, %s2176
          %s2178 = sshll.u32 [#allocation5], 4
          %s2179 = int_to_ptr.vmem [resolvable:$true] %s2178
          %2184 = dma.vmem_to_hbm [thread:$0]  %s2179, 256, %s2177, [#allocation6], 128, 128, 8
        $region96: #{tpu_custom_call.1} parent=83 // pred_fallthru
          _
        // Predicated region
        $region97: #{tpu_custom_call.1} parent=83 // pred_check
          %p2185 = pneg %p459
        $region98: #{tpu_custom_call.1} parent=83 // pred_check_branch
          %2187 = sbr.rel (%p2185) target = $region100
        $region99: #{tpu_custom_call.1} parent=83 // pred_region
          %2188 = dma.done [#allocation6], 256
        $region100: #{tpu_custom_call.1} parent=83 // pred_fallthru
          _
      $region84: #{tpu_custom_call.1} parent=5 // pred_fallthru
        _
      %p2189 = scmp.le.s32.totalorder 2, %s23
      // Predicated region
      $region101: #{tpu_custom_call.1} parent=5 // pred_check
        %p2190 = pneg %p2189
      $region102: #{tpu_custom_call.1} parent=5 // pred_check_branch
        %2192 = sbr.rel (%p2190) target = $region104
      $region103: #{tpu_custom_call.1} parent=5 // pred_region
        %s2193 = ssub.s32 %s23, 2
      $region104: #{tpu_custom_call.1} parent=5 // pred_fallthru
        _
    $region6: #{tpu_custom_call.1} parent=1 // loop_footer
      %s27 = sadd.s32 1, %s23
    $region7: #{tpu_custom_call.1} parent=1 // loop_footer_branch
      %22 = sbr.rel target = $region3
    $region8: #{tpu_custom_call.1} parent=1 // loop_exit
      _
    %2194 = vsyncpa [#allocation6], 1
    %s2195 = scalar_lea.sflag [#allocation6], 1
    %2196 = vsyncpa %s2195, 1

</llo_original>
